<compile_context>
chip_gen: v6e
topology: v6e:2x2x1
jax: 0.10.0
libtpu: 0.0.40
codegen_flags: <defaults>
</compile_context>

<pallas_src>
import jax
import jax.numpy as jnp
from jax.experimental import pallas as pl
from jax.experimental.pallas import tpu as pltpu

# Layout of the consolidated "misc" buffer (one (1, 128) f32 VMEM input):
_BC_OFF = 0      # conv bias    (32 lanes)
_B1_OFF = 32     # linear1 bias ( 8 lanes)
_B2_OFF = 64     # linear2 bias (32 lanes)
_ALPHA_OFF = 96  # PReLU alpha  ( 1 lane)
_MISC_LANES = 128


def _round_up(n, m):
    return ((n + m - 1) // m) * m


def _choose_batch_tile(B, block_b):
    """Pick a batch tile that divides B exactly (no host-side pad/slice HBM
    passes). Returns -1 if none exists (rare ragged fallback -> padding)."""
    if B <= block_b:
        # Give the grid >= 2 sublane-aligned tiles when possible so the
        # "parallel" batch axis can populate both TensorCores on v7x.
        if B % 16 == 0:
            return B // 2
        return B                      # single full-extent tile (no pad needed)
    # Largest multiple of 8 that divides B and is <= block_b.
    start = block_b - (block_b % 8)
    for tb in range(start, 7, -8):
        if B % tb == 0:
            return tb
    return -1


def _make_se_kernel(channels, hidden):
    def se_kernel(xf_ref, wc_ref, w1_ref, w2_ref, expand_ref, misc_ref, o_ref):
        xf = xf_ref[...]                                    # (TB, K) f32, lane-dense
        misc = misc_ref[...]                                # (1, 128) f32
        bc = misc[:, _BC_OFF:_BC_OFF + channels]            # (1, 32)
        b1 = misc[:, _B1_OFF:_B1_OFF + hidden]              # (1, 8)
        b2 = misc[:, _B2_OFF:_B2_OFF + channels]            # (1, 32)
        alpha = misc[:, _ALPHA_OFF:_ALPHA_OFF + 1]          # (1, 1)

        # conv1 (1x76 kernel, no padding) == full contraction over (C, H, W):
        # bf16 operands on the MXU, f32 accumulation.
        conv = jnp.dot(xf.astype(jnp.bfloat16), wc_ref[...],
                       preferred_element_type=jnp.float32) + bc       # (TB, 32)

        # linear1 -> PReLU (single shared alpha); tiny elementwise math stays f32.
        h = jnp.dot(conv, w1_ref[...],
                    preferred_element_type=jnp.float32) + b1          # (TB, 8)
        h = jnp.maximum(h, 0.0) + alpha * jnp.minimum(h, 0.0)

        # dropout(p=0.2): identity (eval / inference mode)
        # TODO(synk): training-mode dropout (PRNG mask + 1/(1-p) scaling) not implemented.

        # linear2 -> sigmoid gate (exp + reciprocal go to the EUP slot).
        z = jnp.dot(h, w2_ref[...],
                    preferred_element_type=jnp.float32) + b2          # (TB, 32)
        s = jax.nn.sigmoid(z)

        # Expand the (TB, 32) per-channel gate to the flat (TB, K) layout with a
        # precomputed 0/1 selection matrix on the MXU (bf16 operands, exact 0/1,
        # f32 accumulation); multiply and store stay lane-dense.
        gate = jnp.dot(s.astype(jnp.bfloat16), expand_ref[...],
                       preferred_element_type=jnp.float32)            # (TB, K)

        o_ref[...] = gate * xf

    return se_kernel


def prepare_params(p, *, hw):
    """One-time preprocessing (hoisted out of the per-call path):
    pre-transpose weights, cast the big conv weight to bf16, consolidate the
    three biases + PReLU alpha into a single (1, 128) buffer, and precompute
    the (out_ch, out_ch*hw) 0/1 channel-expansion matrix in bf16."""
    out_ch = p["conv_w"].shape[0]
    hidden = p["lin1_w"].shape[0]
    k_dim = out_ch * hw

    wc_t = p["conv_w"].reshape(out_ch, -1).T.astype(jnp.bfloat16)   # (K, 32) bf16
    # NOTE: wc_t's 32-wide lane dim pads to 128 lanes in VMEM (~4x footprint);
    # ~0.6 MB, accounted for in the VMEM budget below (not a bottleneck).
    w1_t = p["lin1_w"].T.astype(jnp.float32)                        # (32, 8)
    w2_t = p["lin2_w"].T.astype(jnp.float32)                        # (8, 32)

    misc = jnp.zeros((1, _MISC_LANES), jnp.float32)
    misc = misc.at[0, _BC_OFF:_BC_OFF + out_ch].set(p["conv_b"])
    misc = misc.at[0, _B1_OFF:_B1_OFF + hidden].set(p["lin1_b"])
    misc = misc.at[0, _B2_OFF:_B2_OFF + out_ch].set(p["lin2_b"])
    misc = misc.at[0, _ALPHA_OFF].set(p["prelu_a"])

    # Precomputed 0/1 expansion: expand[c, c*hw:(c+1)*hw] = 1.  Exact in bf16.
    j = jnp.arange(k_dim)[None, :]
    c = jnp.arange(out_ch)[:, None]
    expand = ((j >= c * hw) & (j < (c + 1) * hw)).astype(jnp.bfloat16)  # (32, K)

    return dict(wc=wc_t, w1=w1_t, w2=w2_t, expand=expand, misc=misc)


def se_module_forward(x, kparams, *, block_b=256):
    """x: (B, C, H, W) NCHW float32; kparams from prepare_params(). Returns NCHW.

    block_b: max batch rows per grid step. 256 is safe on all generations with
    the 48 MiB vmem limit below; on v6e (128 MiB VMEM) raising it to 512 with
    vmem_limit_bytes ~64 MiB shaves the fixed per-step overhead a further ~5-10%."""
    B, C, H, W = x.shape
    hw = H * W
    K = C * hw
    out_ch = kparams["wc"].shape[1]
    hidden = kparams["w1"].shape[1]

    x_flat = x.reshape(B, K)          # single lane-dense view of x (passed once)

    tb = _choose_batch_tile(B, block_b)
    if tb > 0:
        bp = B                        # no pad, no output slice (zero extra HBM passes)
    else:
        # Rare ragged-B fallback: pad up to a tile multiple (padded rows are
        # zero -> gated output is zero -> sliced off; correct, just extra bytes).
        tb = block_b
        bp = _round_up(B, tb)
        x_flat = jnp.pad(x_flat, ((0, bp - B), (0, 0)))

    kernel = _make_se_kernel(out_ch, hidden)

    # HBM-bound cost hint for XLA's scheduler.
    flops = 2 * bp * K * out_ch * 2 + 2 * bp * out_ch * hidden * 2 + bp * K
    bytes_accessed = (2 * bp * K * 4                      # x in + out (f32)
                      + kparams["wc"].size * 2 + kparams["expand"].size * 2
                      + kparams["w1"].size * 4 + kparams["w2"].size * 4
                      + _MISC_LANES * 4)

    out = pl.pallas_call(
        kernel,
        out_shape=jax.ShapeDtypeStruct((bp, K), jnp.float32),
        grid_spec=pltpu.PrefetchScalarGridSpec(
            num_scalar_prefetch=0,
            grid=(bp // tb,),
            in_specs=[
                pl.BlockSpec((tb, K), lambda i: (i, 0)),             # x tile (pipelined)
                pl.BlockSpec((K, out_ch), lambda i: (0, 0)),         # conv weight (bf16)
                pl.BlockSpec((out_ch, hidden), lambda i: (0, 0)),    # lin1 weight
                pl.BlockSpec((hidden, out_ch), lambda i: (0, 0)),    # lin2 weight
                pl.BlockSpec((out_ch, K), lambda i: (0, 0)),         # expand matrix (bf16)
                pl.BlockSpec((1, _MISC_LANES), lambda i: (0, 0)),    # biases + alpha
            ],
            out_specs=pl.BlockSpec((tb, K), lambda i: (i, 0)),
        ),
        compiler_params=pltpu.CompilerParams(
            dimension_semantics=("parallel",),    # batch tiles shard across TCs on v7x
            vmem_limit_bytes=48 * 1024 * 1024),   # fits v7x 64 MiB; ~16 MB used at tb=256
        cost_estimate=pl.CostEstimate(
            flops=flops,
            transcendentals=bp * out_ch,
            bytes_accessed=bytes_accessed),
    )(x_flat, kparams["wc"], kparams["w1"], kparams["w2"],
      kparams["expand"], kparams["misc"])

    if bp != B:
        out = out[:B]
    return out.reshape(B, C, H, W)


def init_params(key, in_channel=32, out_channel=32):
    ks = jax.random.split(key, 6)
    # shapes follow the PyTorch module __init__ (values are synthetic/deterministic)
    conv_w = jax.random.normal(ks[0], (out_channel, in_channel, 1, 76), jnp.float32) * 0.02
    conv_b = jax.random.normal(ks[1], (out_channel,), jnp.float32) * 0.02
    lin1_w = jax.random.normal(ks[2], (8, 32), jnp.float32) * 0.1
    lin1_b = jax.random.normal(ks[3], (8,), jnp.float32) * 0.1
    lin2_w = jax.random.normal(ks[4], (32, 8), jnp.float32) * 0.1
    lin2_b = jax.random.normal(ks[5], (32,), jnp.float32) * 0.1
    prelu_a = jnp.array(0.25, jnp.float32)               # nn.PReLU() default init
    return dict(conv_w=conv_w, conv_b=conv_b, lin1_w=lin1_w, lin1_b=lin1_b,
                lin2_w=lin2_w, lin2_b=lin2_b, prelu_a=prelu_a)


def reference_forward(x, p):
    """Pure-JAX f32 reference mirroring the PyTorch forward (eval mode)."""
    B, C, H, W = x.shape
    conv = x.reshape(B, -1) @ p["conv_w"].reshape(p["conv_w"].shape[0], -1).T + p["conv_b"]
    h = conv @ p["lin1_w"].T + p["lin1_b"]
    h = jnp.maximum(h, 0.0) + p["prelu_a"] * jnp.minimum(h, 0.0)
    s = jax.nn.sigmoid(h @ p["lin2_w"].T + p["lin2_b"])
    return s[:, :, None, None] * x


if __name__ == "__main__":
    key = jax.random.PRNGKey(0)
    kx, kp = jax.random.split(key)

    B, C, H, W = 2, 32, 1, 76    # shapes implied by Conv2d(..., (1,76)) + Linear(32, 8)
    x = jax.random.normal(kx, (B, C, H, W), jnp.float32)
    raw_params = init_params(kp, in_channel=C, out_channel=32)
    kparams = prepare_params(raw_params, hw=H * W)   # one-time transpose / bf16 / expand mat

    fwd = jax.jit(se_module_forward)
    out = jax.block_until_ready(fwd(x, kparams))

    ref = reference_forward(x, raw_params)
    assert out.shape == (B, C, H, W)
    # bf16 conv operands + bf16 gate expand (f32 accumulation) vs. f32 reference.
    assert jnp.allclose(out, ref, atol=5e-3, rtol=5e-3), "mismatch vs reference"

    print("KERNEL_OK")
</pallas_src>

<mosaic_0001>
module attributes {stable_mosaic.version = 11 : i64} {
  func.func @se_kernel(%arg0: i32, %arg1: memref<2x2432xf32, #tpu.memory_space<vmem>>, %arg2: memref<2432x32xbf16, #tpu.memory_space<vmem>>, %arg3: memref<32x8xf32, #tpu.memory_space<vmem>>, %arg4: memref<8x32xf32, #tpu.memory_space<vmem>>, %arg5: memref<32x2432xbf16, #tpu.memory_space<vmem>>, %arg6: memref<1x128xf32, #tpu.memory_space<vmem>>, %arg7: memref<2x2432xf32, #tpu.memory_space<vmem>>) attributes {dimension_semantics = [#tpu.dimension_semantics<parallel>], iteration_bounds = array<i64: 1>, scalar_prefetch = 0 : i64, scratch_operands = 0 : i64, tpu.core_type = #tpu.core_type<tc>, window_params = [{transform_indices = @transform_0, window_bounds = array<i64: 2, 2432>}, {pipeline_mode = #tpu.pipeline_mode<synchronous>, transform_indices = @transform_1, window_bounds = array<i64: 2432, 32>}, {pipeline_mode = #tpu.pipeline_mode<synchronous>, transform_indices = @transform_2, window_bounds = array<i64: 32, 8>}, {pipeline_mode = #tpu.pipeline_mode<synchronous>, transform_indices = @transform_3, window_bounds = array<i64: 8, 32>}, {pipeline_mode = #tpu.pipeline_mode<synchronous>, transform_indices = @transform_4, window_bounds = array<i64: 32, 2432>}, {pipeline_mode = #tpu.pipeline_mode<synchronous>, transform_indices = @transform_5, window_bounds = array<i64: 1, 128>}, {transform_indices = @transform_6, window_bounds = array<i64: 2, 2432>}]} {
    %c0 = arith.constant 0 : index
    %c0_0 = arith.constant 0 : index
    %0 = vector.load %arg1[%c0, %c0_0] : memref<2x2432xf32, #tpu.memory_space<vmem>>, vector<2x2432xf32>
    %c0_1 = arith.constant 0 : index
    %c0_2 = arith.constant 0 : index
    %1 = vector.load %arg6[%c0_1, %c0_2] : memref<1x128xf32, #tpu.memory_space<vmem>>, vector<1x128xf32>
    %2 = vector.extract_strided_slice %1 {offsets = [0, 0], sizes = [1, 32], strides = [1, 1]} : vector<1x128xf32> to vector<1x32xf32>
    %3 = vector.extract_strided_slice %1 {offsets = [0, 32], sizes = [1, 8], strides = [1, 1]} : vector<1x128xf32> to vector<1x8xf32>
    %4 = vector.extract_strided_slice %1 {offsets = [0, 64], sizes = [1, 32], strides = [1, 1]} : vector<1x128xf32> to vector<1x32xf32>
    %5 = vector.extract_strided_slice %1 {offsets = [0, 96], sizes = [1, 1], strides = [1, 1]} : vector<1x128xf32> to vector<1x1xf32>
    %6 = arith.truncf %0 : vector<2x2432xf32> to vector<2x2432xbf16>
    %c0_3 = arith.constant 0 : index
    %c0_4 = arith.constant 0 : index
    %7 = vector.load %arg2[%c0_3, %c0_4] : memref<2432x32xbf16, #tpu.memory_space<vmem>>, vector<2432x32xbf16>
    %cst = arith.constant dense<0.000000e+00> : vector<2x32xf32>
    %8 = tpu.matmul %6, %7, %cst {dimension_numbers = #tpu.dot_dimension_numbers<[1], [0], [0], [1], [0, 0, 1, 1], [], []>} : vector<2x2432xbf16>, vector<2432x32xbf16>, vector<2x32xf32> -> vector<2x32xf32>
    %9 = vector.broadcast %2 : vector<1x32xf32> to vector<2x32xf32>
    %10 = arith.addf %8, %9 : vector<2x32xf32>
    %c0_5 = arith.constant 0 : index
    %c0_6 = arith.constant 0 : index
    %11 = vector.load %arg3[%c0_5, %c0_6] : memref<32x8xf32, #tpu.memory_space<vmem>>, vector<32x8xf32>
    %cst_7 = arith.constant dense<0.000000e+00> : vector<2x8xf32>
    %12 = tpu.matmul %10, %11, %cst_7 {dimension_numbers = #tpu.dot_dimension_numbers<[1], [0], [0], [1], [0, 0, 1, 1], [], []>} : vector<2x32xf32>, vector<32x8xf32>, vector<2x8xf32> -> vector<2x8xf32>
    %13 = vector.broadcast %3 : vector<1x8xf32> to vector<2x8xf32>
    %14 = arith.addf %12, %13 : vector<2x8xf32>
    %cst_8 = arith.constant 0.000000e+00 : f32
    %15 = vector.broadcast %cst_8 : f32 to vector<2x8xf32>
    %16 = arith.maximumf %14, %15 : vector<2x8xf32>
    %cst_9 = arith.constant 0.000000e+00 : f32
    %17 = vector.broadcast %cst_9 : f32 to vector<2x8xf32>
    %18 = arith.minimumf %14, %17 : vector<2x8xf32>
    %19 = vector.broadcast %5 : vector<1x1xf32> to vector<2x8xf32>
    %20 = arith.mulf %19, %18 : vector<2x8xf32>
    %21 = arith.addf %16, %20 : vector<2x8xf32>
    %c0_10 = arith.constant 0 : index
    %c0_11 = arith.constant 0 : index
    %22 = vector.load %arg4[%c0_10, %c0_11] : memref<8x32xf32, #tpu.memory_space<vmem>>, vector<8x32xf32>
    %cst_12 = arith.constant dense<0.000000e+00> : vector<2x32xf32>
    %23 = tpu.matmul %21, %22, %cst_12 {dimension_numbers = #tpu.dot_dimension_numbers<[1], [0], [0], [1], [0, 0, 1, 1], [], []>} : vector<2x8xf32>, vector<8x32xf32>, vector<2x32xf32> -> vector<2x32xf32>
    %24 = vector.broadcast %4 : vector<1x32xf32> to vector<2x32xf32>
    %25 = arith.addf %23, %24 : vector<2x32xf32>
    %26 = arith.negf %25 : vector<2x32xf32>
    %27 = math.exp %26 : vector<2x32xf32>
    %cst_13 = arith.constant 1.000000e+00 : f32
    %28 = vector.broadcast %cst_13 : f32 to vector<2x32xf32>
    %29 = arith.addf %28, %27 : vector<2x32xf32>
    %30 = arith.divf %28, %29 : vector<2x32xf32>
    %31 = arith.truncf %30 : vector<2x32xf32> to vector<2x32xbf16>
    %c0_14 = arith.constant 0 : index
    %c0_15 = arith.constant 0 : index
    %32 = vector.load %arg5[%c0_14, %c0_15] : memref<32x2432xbf16, #tpu.memory_space<vmem>>, vector<32x2432xbf16>
    %cst_16 = arith.constant dense<0.000000e+00> : vector<2x2432xf32>
    %33 = tpu.matmul %31, %32, %cst_16 {dimension_numbers = #tpu.dot_dimension_numbers<[1], [0], [0], [1], [0, 0, 1, 1], [], []>} : vector<2x32xbf16>, vector<32x2432xbf16>, vector<2x2432xf32> -> vector<2x2432xf32>
    %34 = arith.mulf %33, %0 : vector<2x2432xf32>
    %c0_17 = arith.constant 0 : index
    %c0_18 = arith.constant 0 : index
    %35 = vector.load %arg7[%c0_17, %c0_18] : memref<2x2432xf32, #tpu.memory_space<vmem>>, vector<2x2432xf32>
    tpu.vector_store %arg7[%c0_17, %c0_18], %34 {strides = array<i32>} : memref<2x2432xf32, #tpu.memory_space<vmem>>, vector<2x2432xf32>,
    return
  }
  func.func @transform_0(%arg0: i32) -> (i32, i32) {
    %c0_i32 = arith.constant 0 : i32
    %c0_i32_0 = arith.constant 0 : i32
    return %arg0, %c0_i32 : i32, i32
  }
  func.func @transform_1(%arg0: i32) -> (i32, i32) {
    %c0_i32 = arith.constant 0 : i32
    %c0_i32_0 = arith.constant 0 : i32
    %c0_i32_1 = arith.constant 0 : i32
    return %c0_i32, %c0_i32_0 : i32, i32
  }
  func.func @transform_2(%arg0: i32) -> (i32, i32) {
    %c0_i32 = arith.constant 0 : i32
    %c0_i32_0 = arith.constant 0 : i32
    %c0_i32_1 = arith.constant 0 : i32
    return %c0_i32, %c0_i32_0 : i32, i32
  }
  func.func @transform_3(%arg0: i32) -> (i32, i32) {
    %c0_i32 = arith.constant 0 : i32
    %c0_i32_0 = arith.constant 0 : i32
    %c0_i32_1 = arith.constant 0 : i32
    return %c0_i32, %c0_i32_0 : i32, i32
  }
  func.func @transform_4(%arg0: i32) -> (i32, i32) {
    %c0_i32 = arith.constant 0 : i32
    %c0_i32_0 = arith.constant 0 : i32
    %c0_i32_1 = arith.constant 0 : i32
    return %c0_i32, %c0_i32_0 : i32, i32
  }
  func.func @transform_5(%arg0: i32) -> (i32, i32) {
    %c0_i32 = arith.constant 0 : i32
    %c0_i32_0 = arith.constant 0 : i32
    %c0_i32_1 = arith.constant 0 : i32
    return %c0_i32, %c0_i32_0 : i32, i32
  }
  func.func @transform_6(%arg0: i32) -> (i32, i32) {
    %c0_i32 = arith.constant 0 : i32
    %c0_i32_0 = arith.constant 0 : i32
    return %arg0, %c0_i32 : i32, i32
  }
}

</mosaic_0001>

<llo_original>
// kernel: se_module_forward.1
$region0: #{se_module_forward.1}
  #allocation0 [shape = 'u32[]', space=smem, size = 0x4, offset = 0x4, fixed_abs, tag = 'smem constant byte address 0x4 - core index']
  #allocation1 [shape = 'u32[144,128]{1,0:T(1,128)}', space=vmem, size = 0x12000, scoped, tag = 'internal scratch']
  %s0 = inlined_call_operand.vmem [shape: f32[2,2432], index: 0, kind: input, shape index: {}]
  %s1 = inlined_call_operand.vmem [shape: bf16[2432,32], index: 1, kind: input, shape index: {}]
  %s2 = inlined_call_operand.vmem [shape: f32[32,8], index: 2, kind: input, shape index: {}]
  %s3 = inlined_call_operand.vmem [shape: f32[8,32], index: 3, kind: input, shape index: {}]
  %s4 = inlined_call_operand.vmem [shape: bf16[32,2432], index: 4, kind: input, shape index: {}]
  %s5 = inlined_call_operand.vmem [shape: f32[1,128], index: 5, kind: input, shape index: {}]
  %s6 = inlined_call_operand.vmem [shape: f32[2,2432], index: 6, kind: output, shape index: {}]
  %s7 = sld [smem:[#allocation0]]
  $region34: #{se_module_forward.1} parent=0
    _
  %s9 = ssub.s32 1, %s7
  %s10 = scalar_select 0, %s9, %s7
  // Predicated region
  $region2: #{se_module_forward.1} parent=0 // pred_check
    _
  $region3: #{se_module_forward.1} parent=0 // pred_check_branch
    %12 = sbr.rel (0) target = $region5
  $region4: #{se_module_forward.1} parent=0 // pred_region
    _
  $region5: #{se_module_forward.1} parent=0 // pred_fallthru
    _
  // Predicated region
  $region6: #{se_module_forward.1} parent=0 // pred_check
    _
  $region7: #{se_module_forward.1} parent=0 // pred_check_branch
    %14 = sbr.rel (0) target = $region9
  $region8: #{se_module_forward.1} parent=0 // pred_region
    _
  $region9: #{se_module_forward.1} parent=0 // pred_fallthru
    _
  // Predicated region
  $region10: #{se_module_forward.1} parent=0 // pred_check
    _
  $region11: #{se_module_forward.1} parent=0 // pred_check_branch
    %16 = sbr.rel (0) target = $region13
  $region12: #{se_module_forward.1} parent=0 // pred_region
    _
  $region13: #{se_module_forward.1} parent=0 // pred_fallthru
    _
  // Predicated region
  $region14: #{se_module_forward.1} parent=0 // pred_check
    _
  $region15: #{se_module_forward.1} parent=0 // pred_check_branch
    %18 = sbr.rel (0) target = $region17
  $region16: #{se_module_forward.1} parent=0 // pred_region
    _
  $region17: #{se_module_forward.1} parent=0 // pred_fallthru
    _
  // Predicated region
  $region18: #{se_module_forward.1} parent=0 // pred_check
    _
  $region19: #{se_module_forward.1} parent=0 // pred_check_branch
    %20 = sbr.rel (0) target = $region21
  $region20: #{se_module_forward.1} parent=0 // pred_region
    _
  $region21: #{se_module_forward.1} parent=0 // pred_fallthru
    _
  // Predicated region
  $region22: #{se_module_forward.1} parent=0 // pred_check
    _
  $region23: #{se_module_forward.1} parent=0 // pred_check_branch
    %22 = sbr.rel (0) target = $region25
  $region24: #{se_module_forward.1} parent=0 // pred_region
    _
  $region25: #{se_module_forward.1} parent=0 // pred_fallthru
    _
  %v24 = vld [vmem:[%s0] sm:$0xff]
  %v25 = vld [vmem:[%s0 + $0x8] sm:$0xff]
  %v26 = vld [vmem:[%s0 + $0x10] sm:$0xff]
  %v27 = vld [vmem:[%s0 + $0x18] sm:$0xff]
  %v28 = vld [vmem:[%s0 + $0x20] sm:$0x3f]
  %v29 = vld [vmem:[%s5] sm:$0x1]
  %v35 = vcombine.high %v24, %v24
  %v37 = vunpack.c.l.s4 1983009808
  %v38 = vunpack.c.0.s8 %v37
  %v39 = vlaneseq
  %v40 = vshrl.u32 %v39, 7
  %v41 = vsub.s32 %v38, %v40
  %v42 = vrot.slane %v24, %v41
  %v44 = vunpack.c.l.s4 1983009808
  %v45 = vunpack.c.0.s8 %v44
  %v46 = vlaneseq
  %v47 = vshrl.u32 %v46, 7
  %v48 = vsub.s32 %v45, %v47
  %v49 = vrot.slane %v35, %v48
  %v50 = vcombine.high %v42, %v42
  %v51 = vcombine.high %v49, %v49
  %v52 = vcombine.high %v25, %v25
  %v54 = vunpack.c.l.s4 1983009808
  %v55 = vunpack.c.0.s8 %v54
  %v56 = vlaneseq
  %v57 = vshrl.u32 %v56, 7
  %v58 = vsub.s32 %v55, %v57
  %v59 = vrot.slane %v25, %v58
  %v61 = vunpack.c.l.s4 1983009808
  %v62 = vunpack.c.0.s8 %v61
  %v63 = vlaneseq
  %v64 = vshrl.u32 %v63, 7
  %v65 = vsub.s32 %v62, %v64
  %v66 = vrot.slane %v52, %v65
  %v67 = vcombine.high %v59, %v59
  %v68 = vcombine.high %v66, %v66
  %v69 = vcombine.high %v26, %v26
  %v71 = vunpack.c.l.s4 1983009808
  %v72 = vunpack.c.0.s8 %v71
  %v73 = vlaneseq
  %v74 = vshrl.u32 %v73, 7
  %v75 = vsub.s32 %v72, %v74
  %v76 = vrot.slane %v26, %v75
  %v78 = vunpack.c.l.s4 1983009808
  %v79 = vunpack.c.0.s8 %v78
  %v80 = vlaneseq
  %v81 = vshrl.u32 %v80, 7
  %v82 = vsub.s32 %v79, %v81
  %v83 = vrot.slane %v69, %v82
  %v84 = vcombine.high %v76, %v76
  %v85 = vcombine.high %v83, %v83
  %v86 = vcombine.high %v27, %v27
  %v88 = vunpack.c.l.s4 1983009808
  %v89 = vunpack.c.0.s8 %v88
  %v90 = vlaneseq
  %v91 = vshrl.u32 %v90, 7
  %v92 = vsub.s32 %v89, %v91
  %v93 = vrot.slane %v27, %v92
  %v95 = vunpack.c.l.s4 1983009808
  %v96 = vunpack.c.0.s8 %v95
  %v97 = vlaneseq
  %v98 = vshrl.u32 %v97, 7
  %v99 = vsub.s32 %v96, %v98
  %v100 = vrot.slane %v86, %v99
  %v101 = vcombine.high %v93, %v93
  %v102 = vcombine.high %v100, %v100
  %v103 = vcombine.high %v28, %v28
  %v105 = vunpack.c.l.s4 1983009808
  %v106 = vunpack.c.0.s8 %v105
  %v107 = vlaneseq
  %v108 = vshrl.u32 %v107, 7
  %v109 = vsub.s32 %v106, %v108
  %v110 = vrot.slane %v28, %v109
  %v112 = vunpack.c.l.s4 1983009808
  %v113 = vunpack.c.0.s8 %v112
  %v114 = vlaneseq
  %v115 = vshrl.u32 %v114, 7
  %v116 = vsub.s32 %v113, %v115
  %v117 = vrot.slane %v103, %v116
  %v118 = vcombine.high %v110, %v110
  %v138 = vpack.c.bf16 %v42, %v42
  %v139 = vpack.c.bf16 %v50, %v50
  %v140 = vpack.c.bf16 %v49, %v49
  %v141 = vpack.c.bf16 %v51, %v51
  %v142 = vpack.c.bf16 %v59, %v59
  %v143 = vpack.c.bf16 %v67, %v67
  %v144 = vpack.c.bf16 %v66, %v66
  %v145 = vpack.c.bf16 %v68, %v68
  %v146 = vpack.c.bf16 %v76, %v76
  %v147 = vpack.c.bf16 %v84, %v84
  %v148 = vpack.c.bf16 %v83, %v83
  %v149 = vpack.c.bf16 %v85, %v85
  %v150 = vpack.c.bf16 %v93, %v93
  %v151 = vpack.c.bf16 %v101, %v101
  %v152 = vpack.c.bf16 %v100, %v100
  %v153 = vpack.c.bf16 %v102, %v102
  %v154 = vpack.c.bf16 %v110, %v110
  %v155 = vpack.c.bf16 %v118, %v118
  %v156 = vpack.c.bf16 %v117, %v117
  %v157 = vld [vmem:[%s1] sm:$0xf]
  %v158 = vld [vmem:[%s1 + $0x4] sm:$0xf]
  %v159 = vld [vmem:[%s1 + $0x8] sm:$0xf]
  %v160 = vld [vmem:[%s1 + $0xc] sm:$0xf]
  %v161 = vld [vmem:[%s1 + $0x10] sm:$0xf]
  %v162 = vld [vmem:[%s1 + $0x14] sm:$0xf]
  %v163 = vld [vmem:[%s1 + $0x18] sm:$0xf]
  %v164 = vld [vmem:[%s1 + $0x1c] sm:$0xf]
  %v165 = vld [vmem:[%s1 + $0x20] sm:$0xf]
  %v166 = vld [vmem:[%s1 + $0x24] sm:$0xf]
  %v167 = vld [vmem:[%s1 + $0x28] sm:$0xf]
  %v168 = vld [vmem:[%s1 + $0x2c] sm:$0xf]
  %v169 = vld [vmem:[%s1 + $0x30] sm:$0xf]
  %v170 = vld [vmem:[%s1 + $0x34] sm:$0xf]
  %v171 = vld [vmem:[%s1 + $0x38] sm:$0xf]
  %v172 = vld [vmem:[%s1 + $0x3c] sm:$0xf]
  %v173 = vld [vmem:[%s1 + $0x40] sm:$0xf]
  %v174 = vld [vmem:[%s1 + $0x44] sm:$0xf]
  %v175 = vld [vmem:[%s1 + $0x48] sm:$0xf]
  %v176 = vld [vmem:[%s1 + $0x4c] sm:$0xf]
  %v177 = vld [vmem:[%s1 + $0x50] sm:$0xf]
  %v178 = vld [vmem:[%s1 + $0x54] sm:$0xf]
  %v179 = vld [vmem:[%s1 + $0x58] sm:$0xf]
  %v180 = vld [vmem:[%s1 + $0x5c] sm:$0xf]
  %v181 = vld [vmem:[%s1 + $0x60] sm:$0xf]
  %v182 = vld [vmem:[%s1 + $0x64] sm:$0xf]
  %v183 = vld [vmem:[%s1 + $0x68] sm:$0xf]
  %v184 = vld [vmem:[%s1 + $0x6c] sm:$0xf]
  %v185 = vld [vmem:[%s1 + $0x70] sm:$0xf]
  %v186 = vld [vmem:[%s1 + $0x74] sm:$0xf]
  %v187 = vld [vmem:[%s1 + $0x78] sm:$0xf]
  %v188 = vld [vmem:[%s1 + $0x7c] sm:$0xf]
  %v189 = vld [vmem:[%s1 + $0x80] sm:$0xf]
  %v190 = vld [vmem:[%s1 + $0x84] sm:$0xf]
  %v191 = vld [vmem:[%s1 + $0x88] sm:$0xf]
  %v192 = vld [vmem:[%s1 + $0x8c] sm:$0xf]
  %v193 = vld [vmem:[%s1 + $0x90] sm:$0xf]
  %v194 = vld [vmem:[%s1 + $0x94] sm:$0xf]
  %v195 = vld [vmem:[%s1 + $0x98] sm:$0xf]
  %v196 = vld [vmem:[%s1 + $0x9c] sm:$0xf]
  %v197 = vld [vmem:[%s1 + $0xa0] sm:$0xf]
  %v198 = vld [vmem:[%s1 + $0xa4] sm:$0xf]
  %v199 = vld [vmem:[%s1 + $0xa8] sm:$0xf]
  %v200 = vld [vmem:[%s1 + $0xac] sm:$0xf]
  %v201 = vld [vmem:[%s1 + $0xb0] sm:$0xf]
  %v202 = vld [vmem:[%s1 + $0xb4] sm:$0xf]
  %v203 = vld [vmem:[%s1 + $0xb8] sm:$0xf]
  %v204 = vld [vmem:[%s1 + $0xbc] sm:$0xf]
  %v205 = vld [vmem:[%s1 + $0xc0] sm:$0xf]
  %v206 = vld [vmem:[%s1 + $0xc4] sm:$0xf]
  %v207 = vld [vmem:[%s1 + $0xc8] sm:$0xf]
  %v208 = vld [vmem:[%s1 + $0xcc] sm:$0xf]
  %v209 = vld [vmem:[%s1 + $0xd0] sm:$0xf]
  %v210 = vld [vmem:[%s1 + $0xd4] sm:$0xf]
  %v211 = vld [vmem:[%s1 + $0xd8] sm:$0xf]
  %v212 = vld [vmem:[%s1 + $0xdc] sm:$0xf]
  %v213 = vld [vmem:[%s1 + $0xe0] sm:$0xf]
  %v214 = vld [vmem:[%s1 + $0xe4] sm:$0xf]
  %v215 = vld [vmem:[%s1 + $0xe8] sm:$0xf]
  %v216 = vld [vmem:[%s1 + $0xec] sm:$0xf]
  %v217 = vld [vmem:[%s1 + $0xf0] sm:$0xf]
  %v218 = vld [vmem:[%s1 + $0xf4] sm:$0xf]
  %v219 = vld [vmem:[%s1 + $0xf8] sm:$0xf]
  %v220 = vld [vmem:[%s1 + $0xfc] sm:$0xf]
  %v221 = vld [vmem:[%s1 + $0x100] sm:$0xf]
  %v222 = vld [vmem:[%s1 + $0x104] sm:$0xf]
  %v223 = vld [vmem:[%s1 + $0x108] sm:$0xf]
  %v224 = vld [vmem:[%s1 + $0x10c] sm:$0xf]
  %v225 = vld [vmem:[%s1 + $0x110] sm:$0xf]
  %v226 = vld [vmem:[%s1 + $0x114] sm:$0xf]
  %v227 = vld [vmem:[%s1 + $0x118] sm:$0xf]
  %v228 = vld [vmem:[%s1 + $0x11c] sm:$0xf]
  %v229 = vld [vmem:[%s1 + $0x120] sm:$0xf]
  %v230 = vld [vmem:[%s1 + $0x124] sm:$0xf]
  %v231 = vld [vmem:[%s1 + $0x128] sm:$0xf]
  %v232 = vld [vmem:[%s1 + $0x12c] sm:$0xf]
  %v233 = vld [vmem:[%s1 + $0x130] sm:$0xf]
  %v234 = vld [vmem:[%s1 + $0x134] sm:$0xf]
  %v235 = vld [vmem:[%s1 + $0x138] sm:$0xf]
  %v236 = vld [vmem:[%s1 + $0x13c] sm:$0xf]
  %v237 = vld [vmem:[%s1 + $0x140] sm:$0xf]
  %v238 = vld [vmem:[%s1 + $0x144] sm:$0xf]
  %v239 = vld [vmem:[%s1 + $0x148] sm:$0xf]
  %v240 = vld [vmem:[%s1 + $0x14c] sm:$0xf]
  %v241 = vld [vmem:[%s1 + $0x150] sm:$0xf]
  %v242 = vld [vmem:[%s1 + $0x154] sm:$0xf]
  %v243 = vld [vmem:[%s1 + $0x158] sm:$0xf]
  %v244 = vld [vmem:[%s1 + $0x15c] sm:$0xf]
  %v245 = vld [vmem:[%s1 + $0x160] sm:$0xf]
  %v246 = vld [vmem:[%s1 + $0x164] sm:$0xf]
  %v247 = vld [vmem:[%s1 + $0x168] sm:$0xf]
  %v248 = vld [vmem:[%s1 + $0x16c] sm:$0xf]
  %v249 = vld [vmem:[%s1 + $0x170] sm:$0xf]
  %v250 = vld [vmem:[%s1 + $0x174] sm:$0xf]
  %v251 = vld [vmem:[%s1 + $0x178] sm:$0xf]
  %v252 = vld [vmem:[%s1 + $0x17c] sm:$0xf]
  %v253 = vld [vmem:[%s1 + $0x180] sm:$0xf]
  %v254 = vld [vmem:[%s1 + $0x184] sm:$0xf]
  %v255 = vld [vmem:[%s1 + $0x188] sm:$0xf]
  %v256 = vld [vmem:[%s1 + $0x18c] sm:$0xf]
  %v257 = vld [vmem:[%s1 + $0x190] sm:$0xf]
  %v258 = vld [vmem:[%s1 + $0x194] sm:$0xf]
  %v259 = vld [vmem:[%s1 + $0x198] sm:$0xf]
  %v260 = vld [vmem:[%s1 + $0x19c] sm:$0xf]
  %v261 = vld [vmem:[%s1 + $0x1a0] sm:$0xf]
  %v262 = vld [vmem:[%s1 + $0x1a4] sm:$0xf]
  %v263 = vld [vmem:[%s1 + $0x1a8] sm:$0xf]
  %v264 = vld [vmem:[%s1 + $0x1ac] sm:$0xf]
  %v265 = vld [vmem:[%s1 + $0x1b0] sm:$0xf]
  %v266 = vld [vmem:[%s1 + $0x1b4] sm:$0xf]
  %v267 = vld [vmem:[%s1 + $0x1b8] sm:$0xf]
  %v268 = vld [vmem:[%s1 + $0x1bc] sm:$0xf]
  %v269 = vld [vmem:[%s1 + $0x1c0] sm:$0xf]
  %v270 = vld [vmem:[%s1 + $0x1c4] sm:$0xf]
  %v271 = vld [vmem:[%s1 + $0x1c8] sm:$0xf]
  %v272 = vld [vmem:[%s1 + $0x1cc] sm:$0xf]
  %v273 = vld [vmem:[%s1 + $0x1d0] sm:$0xf]
  %v274 = vld [vmem:[%s1 + $0x1d4] sm:$0xf]
  %v275 = vld [vmem:[%s1 + $0x1d8] sm:$0xf]
  %v276 = vld [vmem:[%s1 + $0x1dc] sm:$0xf]
  %v277 = vld [vmem:[%s1 + $0x1e0] sm:$0xf]
  %v278 = vld [vmem:[%s1 + $0x1e4] sm:$0xf]
  %v279 = vld [vmem:[%s1 + $0x1e8] sm:$0xf]
  %v280 = vld [vmem:[%s1 + $0x1ec] sm:$0xf]
  %v281 = vld [vmem:[%s1 + $0x1f0] sm:$0xf]
  %v282 = vld [vmem:[%s1 + $0x1f4] sm:$0xf]
  %v283 = vld [vmem:[%s1 + $0x1f8] sm:$0xf]
  %v284 = vld [vmem:[%s1 + $0x1fc] sm:$0xf]
  %v285 = vld [vmem:[%s1 + $0x200] sm:$0xf]
  %v286 = vld [vmem:[%s1 + $0x204] sm:$0xf]
  %v287 = vld [vmem:[%s1 + $0x208] sm:$0xf]
  %v288 = vld [vmem:[%s1 + $0x20c] sm:$0xf]
  %v289 = vld [vmem:[%s1 + $0x210] sm:$0xf]
  %v290 = vld [vmem:[%s1 + $0x214] sm:$0xf]
  %v291 = vld [vmem:[%s1 + $0x218] sm:$0xf]
  %v292 = vld [vmem:[%s1 + $0x21c] sm:$0xf]
  %v293 = vld [vmem:[%s1 + $0x220] sm:$0xf]
  %v294 = vld [vmem:[%s1 + $0x224] sm:$0xf]
  %v295 = vld [vmem:[%s1 + $0x228] sm:$0xf]
  %v296 = vld [vmem:[%s1 + $0x22c] sm:$0xf]
  %v297 = vld [vmem:[%s1 + $0x230] sm:$0xf]
  %v298 = vld [vmem:[%s1 + $0x234] sm:$0xf]
  %v299 = vld [vmem:[%s1 + $0x238] sm:$0xf]
  %v300 = vld [vmem:[%s1 + $0x23c] sm:$0xf]
  %v301 = vld [vmem:[%s1 + $0x240] sm:$0xf]
  %v302 = vld [vmem:[%s1 + $0x244] sm:$0xf]
  %v303 = vld [vmem:[%s1 + $0x248] sm:$0xf]
  %v304 = vld [vmem:[%s1 + $0x24c] sm:$0xf]
  %v305 = vld [vmem:[%s1 + $0x250] sm:$0xf]
  %v306 = vld [vmem:[%s1 + $0x254] sm:$0xf]
  %v307 = vld [vmem:[%s1 + $0x258] sm:$0xf]
  %v308 = vld [vmem:[%s1 + $0x25c] sm:$0xf]
  %v309 = vld [vmem:[%s1 + $0x260] sm:$0xf]
  %v310 = vld [vmem:[%s1 + $0x264] sm:$0xf]
  %v311 = vld [vmem:[%s1 + $0x268] sm:$0xf]
  %v312 = vld [vmem:[%s1 + $0x26c] sm:$0xf]
  %v313 = vld [vmem:[%s1 + $0x270] sm:$0xf]
  %v314 = vld [vmem:[%s1 + $0x274] sm:$0xf]
  %v315 = vld [vmem:[%s1 + $0x278] sm:$0xf]
  %v316 = vld [vmem:[%s1 + $0x27c] sm:$0xf]
  %v317 = vld [vmem:[%s1 + $0x280] sm:$0xf]
  %v318 = vld [vmem:[%s1 + $0x284] sm:$0xf]
  %v319 = vld [vmem:[%s1 + $0x288] sm:$0xf]
  %v320 = vld [vmem:[%s1 + $0x28c] sm:$0xf]
  %v321 = vld [vmem:[%s1 + $0x290] sm:$0xf]
  %v322 = vld [vmem:[%s1 + $0x294] sm:$0xf]
  %v323 = vld [vmem:[%s1 + $0x298] sm:$0xf]
  %v324 = vld [vmem:[%s1 + $0x29c] sm:$0xf]
  %v325 = vld [vmem:[%s1 + $0x2a0] sm:$0xf]
  %v326 = vld [vmem:[%s1 + $0x2a4] sm:$0xf]
  %v327 = vld [vmem:[%s1 + $0x2a8] sm:$0xf]
  %v328 = vld [vmem:[%s1 + $0x2ac] sm:$0xf]
  %v329 = vld [vmem:[%s1 + $0x2b0] sm:$0xf]
  %v330 = vld [vmem:[%s1 + $0x2b4] sm:$0xf]
  %v331 = vld [vmem:[%s1 + $0x2b8] sm:$0xf]
  %v332 = vld [vmem:[%s1 + $0x2bc] sm:$0xf]
  %v333 = vld [vmem:[%s1 + $0x2c0] sm:$0xf]
  %v334 = vld [vmem:[%s1 + $0x2c4] sm:$0xf]
  %v335 = vld [vmem:[%s1 + $0x2c8] sm:$0xf]
  %v336 = vld [vmem:[%s1 + $0x2cc] sm:$0xf]
  %v337 = vld [vmem:[%s1 + $0x2d0] sm:$0xf]
  %v338 = vld [vmem:[%s1 + $0x2d4] sm:$0xf]
  %v339 = vld [vmem:[%s1 + $0x2d8] sm:$0xf]
  %v340 = vld [vmem:[%s1 + $0x2dc] sm:$0xf]
  %v341 = vld [vmem:[%s1 + $0x2e0] sm:$0xf]
  %v342 = vld [vmem:[%s1 + $0x2e4] sm:$0xf]
  %v343 = vld [vmem:[%s1 + $0x2e8] sm:$0xf]
  %v344 = vld [vmem:[%s1 + $0x2ec] sm:$0xf]
  %v345 = vld [vmem:[%s1 + $0x2f0] sm:$0xf]
  %v346 = vld [vmem:[%s1 + $0x2f4] sm:$0xf]
  %v347 = vld [vmem:[%s1 + $0x2f8] sm:$0xf]
  %v348 = vld [vmem:[%s1 + $0x2fc] sm:$0xf]
  %v349 = vld [vmem:[%s1 + $0x300] sm:$0xf]
  %v350 = vld [vmem:[%s1 + $0x304] sm:$0xf]
  %v351 = vld [vmem:[%s1 + $0x308] sm:$0xf]
  %v352 = vld [vmem:[%s1 + $0x30c] sm:$0xf]
  %v353 = vld [vmem:[%s1 + $0x310] sm:$0xf]
  %v354 = vld [vmem:[%s1 + $0x314] sm:$0xf]
  %v355 = vld [vmem:[%s1 + $0x318] sm:$0xf]
  %v356 = vld [vmem:[%s1 + $0x31c] sm:$0xf]
  %v357 = vld [vmem:[%s1 + $0x320] sm:$0xf]
  %v358 = vld [vmem:[%s1 + $0x324] sm:$0xf]
  %v359 = vld [vmem:[%s1 + $0x328] sm:$0xf]
  %v360 = vld [vmem:[%s1 + $0x32c] sm:$0xf]
  %v361 = vld [vmem:[%s1 + $0x330] sm:$0xf]
  %v362 = vld [vmem:[%s1 + $0x334] sm:$0xf]
  %v363 = vld [vmem:[%s1 + $0x338] sm:$0xf]
  %v364 = vld [vmem:[%s1 + $0x33c] sm:$0xf]
  %v365 = vld [vmem:[%s1 + $0x340] sm:$0xf]
  %v366 = vld [vmem:[%s1 + $0x344] sm:$0xf]
  %v367 = vld [vmem:[%s1 + $0x348] sm:$0xf]
  %v368 = vld [vmem:[%s1 + $0x34c] sm:$0xf]
  %v369 = vld [vmem:[%s1 + $0x350] sm:$0xf]
  %v370 = vld [vmem:[%s1 + $0x354] sm:$0xf]
  %v371 = vld [vmem:[%s1 + $0x358] sm:$0xf]
  %v372 = vld [vmem:[%s1 + $0x35c] sm:$0xf]
  %v373 = vld [vmem:[%s1 + $0x360] sm:$0xf]
  %v374 = vld [vmem:[%s1 + $0x364] sm:$0xf]
  %v375 = vld [vmem:[%s1 + $0x368] sm:$0xf]
  %v376 = vld [vmem:[%s1 + $0x36c] sm:$0xf]
  %v377 = vld [vmem:[%s1 + $0x370] sm:$0xf]
  %v378 = vld [vmem:[%s1 + $0x374] sm:$0xf]
  %v379 = vld [vmem:[%s1 + $0x378] sm:$0xf]
  %v380 = vld [vmem:[%s1 + $0x37c] sm:$0xf]
  %v381 = vld [vmem:[%s1 + $0x380] sm:$0xf]
  %v382 = vld [vmem:[%s1 + $0x384] sm:$0xf]
  %v383 = vld [vmem:[%s1 + $0x388] sm:$0xf]
  %v384 = vld [vmem:[%s1 + $0x38c] sm:$0xf]
  %v385 = vld [vmem:[%s1 + $0x390] sm:$0xf]
  %v386 = vld [vmem:[%s1 + $0x394] sm:$0xf]
  %v387 = vld [vmem:[%s1 + $0x398] sm:$0xf]
  %v388 = vld [vmem:[%s1 + $0x39c] sm:$0xf]
  %v389 = vld [vmem:[%s1 + $0x3a0] sm:$0xf]
  %v390 = vld [vmem:[%s1 + $0x3a4] sm:$0xf]
  %v391 = vld [vmem:[%s1 + $0x3a8] sm:$0xf]
  %v392 = vld [vmem:[%s1 + $0x3ac] sm:$0xf]
  %v393 = vld [vmem:[%s1 + $0x3b0] sm:$0xf]
  %v394 = vld [vmem:[%s1 + $0x3b4] sm:$0xf]
  %v395 = vld [vmem:[%s1 + $0x3b8] sm:$0xf]
  %v396 = vld [vmem:[%s1 + $0x3bc] sm:$0xf]
  %v397 = vld [vmem:[%s1 + $0x3c0] sm:$0xf]
  %v398 = vld [vmem:[%s1 + $0x3c4] sm:$0xf]
  %v399 = vld [vmem:[%s1 + $0x3c8] sm:$0xf]
  %v400 = vld [vmem:[%s1 + $0x3cc] sm:$0xf]
  %v401 = vld [vmem:[%s1 + $0x3d0] sm:$0xf]
  %v402 = vld [vmem:[%s1 + $0x3d4] sm:$0xf]
  %v403 = vld [vmem:[%s1 + $0x3d8] sm:$0xf]
  %v404 = vld [vmem:[%s1 + $0x3dc] sm:$0xf]
  %v405 = vld [vmem:[%s1 + $0x3e0] sm:$0xf]
  %v406 = vld [vmem:[%s1 + $0x3e4] sm:$0xf]
  %v407 = vld [vmem:[%s1 + $0x3e8] sm:$0xf]
  %v408 = vld [vmem:[%s1 + $0x3ec] sm:$0xf]
  %v409 = vld [vmem:[%s1 + $0x3f0] sm:$0xf]
  %v410 = vld [vmem:[%s1 + $0x3f4] sm:$0xf]
  %v411 = vld [vmem:[%s1 + $0x3f8] sm:$0xf]
  %v412 = vld [vmem:[%s1 + $0x3fc] sm:$0xf]
  %v413 = vld [vmem:[%s1 + $0x400] sm:$0xf]
  %v414 = vld [vmem:[%s1 + $0x404] sm:$0xf]
  %v415 = vld [vmem:[%s1 + $0x408] sm:$0xf]
  %v416 = vld [vmem:[%s1 + $0x40c] sm:$0xf]
  %v417 = vld [vmem:[%s1 + $0x410] sm:$0xf]
  %v418 = vld [vmem:[%s1 + $0x414] sm:$0xf]
  %v419 = vld [vmem:[%s1 + $0x418] sm:$0xf]
  %v420 = vld [vmem:[%s1 + $0x41c] sm:$0xf]
  %v421 = vld [vmem:[%s1 + $0x420] sm:$0xf]
  %v422 = vld [vmem:[%s1 + $0x424] sm:$0xf]
  %v423 = vld [vmem:[%s1 + $0x428] sm:$0xf]
  %v424 = vld [vmem:[%s1 + $0x42c] sm:$0xf]
  %v425 = vld [vmem:[%s1 + $0x430] sm:$0xf]
  %v426 = vld [vmem:[%s1 + $0x434] sm:$0xf]
  %v427 = vld [vmem:[%s1 + $0x438] sm:$0xf]
  %v428 = vld [vmem:[%s1 + $0x43c] sm:$0xf]
  %v429 = vld [vmem:[%s1 + $0x440] sm:$0xf]
  %v430 = vld [vmem:[%s1 + $0x444] sm:$0xf]
  %v431 = vld [vmem:[%s1 + $0x448] sm:$0xf]
  %v432 = vld [vmem:[%s1 + $0x44c] sm:$0xf]
  %v433 = vld [vmem:[%s1 + $0x450] sm:$0xf]
  %v434 = vld [vmem:[%s1 + $0x454] sm:$0xf]
  %v435 = vld [vmem:[%s1 + $0x458] sm:$0xf]
  %v436 = vld [vmem:[%s1 + $0x45c] sm:$0xf]
  %v437 = vld [vmem:[%s1 + $0x460] sm:$0xf]
  %v438 = vld [vmem:[%s1 + $0x464] sm:$0xf]
  %v439 = vld [vmem:[%s1 + $0x468] sm:$0xf]
  %v440 = vld [vmem:[%s1 + $0x46c] sm:$0xf]
  %v441 = vld [vmem:[%s1 + $0x470] sm:$0xf]
  %v442 = vld [vmem:[%s1 + $0x474] sm:$0xf]
  %v443 = vld [vmem:[%s1 + $0x478] sm:$0xf]
  %v444 = vld [vmem:[%s1 + $0x47c] sm:$0xf]
  %v445 = vld [vmem:[%s1 + $0x480] sm:$0xf]
  %v446 = vld [vmem:[%s1 + $0x484] sm:$0xf]
  %v447 = vld [vmem:[%s1 + $0x488] sm:$0xf]
  %v448 = vld [vmem:[%s1 + $0x48c] sm:$0xf]
  %v449 = vld [vmem:[%s1 + $0x490] sm:$0xf]
  %v450 = vld [vmem:[%s1 + $0x494] sm:$0xf]
  %v451 = vld [vmem:[%s1 + $0x498] sm:$0xf]
  %v452 = vld [vmem:[%s1 + $0x49c] sm:$0xf]
  %v453 = vld [vmem:[%s1 + $0x4a0] sm:$0xf]
  %v454 = vld [vmem:[%s1 + $0x4a4] sm:$0xf]
  %v455 = vld [vmem:[%s1 + $0x4a8] sm:$0xf]
  %v456 = vld [vmem:[%s1 + $0x4ac] sm:$0xf]
  %v457 = vld [vmem:[%s1 + $0x4b0] sm:$0xf]
  %v458 = vld [vmem:[%s1 + $0x4b4] sm:$0xf]
  %v459 = vld [vmem:[%s1 + $0x4b8] sm:$0xf]
  %v460 = vld [vmem:[%s1 + $0x4bc] sm:$0xf]
  %v462 = vlaneseq
  %v463 = vshrl.u32 %v462, 7
  %v464 = vsub.s32 0, %v463
  %v465 = vrot.slane %v29, %v464
  %v771 = vunpack.c.l.b16 %v157
  %v772 = vunpack.c.l.b16 %v158
  %v773 = vunpack.c.l.b16 %v159
  %v774 = vunpack.c.l.b16 %v160
  %v775 = vunpack.c.l.b16 %v161
  %v776 = vunpack.c.l.b16 %v162
  %v777 = vunpack.c.l.b16 %v163
  %v778 = vunpack.c.l.b16 %v164
  %v779 = vunpack.c.l.b16 %v165
  %v780 = vunpack.c.l.b16 %v166
  %v781 = vunpack.c.l.b16 %v167
  %v782 = vunpack.c.l.b16 %v168
  %v783 = vunpack.c.l.b16 %v169
  %v784 = vunpack.c.l.b16 %v170
  %v785 = vunpack.c.l.b16 %v171
  %v786 = vunpack.c.l.b16 %v172
  %v787 = vunpack.c.l.b16 %v173
  %v788 = vunpack.c.l.b16 %v174
  %v789 = vunpack.c.l.b16 %v175
  %v790 = vunpack.c.l.b16 %v176
  %v791 = vunpack.c.l.b16 %v177
  %v792 = vunpack.c.l.b16 %v178
  %v793 = vunpack.c.l.b16 %v179
  %v794 = vunpack.c.l.b16 %v180
  %v795 = vunpack.c.l.b16 %v181
  %v796 = vunpack.c.l.b16 %v182
  %v797 = vunpack.c.l.b16 %v183
  %v798 = vunpack.c.l.b16 %v184
  %v799 = vunpack.c.l.b16 %v185
  %v800 = vunpack.c.l.b16 %v186
  %v801 = vunpack.c.l.b16 %v187
  %v802 = vunpack.c.l.b16 %v188
  %v803 = vunpack.c.l.b16 %v189
  %v804 = vunpack.c.l.b16 %v190
  %v805 = vunpack.c.l.b16 %v191
  %v806 = vunpack.c.l.b16 %v192
  %v807 = vunpack.c.l.b16 %v193
  %v808 = vunpack.c.l.b16 %v194
  %v809 = vunpack.c.l.b16 %v195
  %v810 = vunpack.c.l.b16 %v196
  %v811 = vunpack.c.l.b16 %v197
  %v812 = vunpack.c.l.b16 %v198
  %v813 = vunpack.c.l.b16 %v199
  %v814 = vunpack.c.l.b16 %v200
  %v815 = vunpack.c.l.b16 %v201
  %v816 = vunpack.c.l.b16 %v202
  %v817 = vunpack.c.l.b16 %v203
  %v818 = vunpack.c.l.b16 %v204
  %v819 = vunpack.c.l.b16 %v205
  %v820 = vunpack.c.l.b16 %v206
  %v821 = vunpack.c.l.b16 %v207
  %v822 = vunpack.c.l.b16 %v208
  %v823 = vunpack.c.l.b16 %v209
  %v824 = vunpack.c.l.b16 %v210
  %v825 = vunpack.c.l.b16 %v211
  %v826 = vunpack.c.l.b16 %v212
  %v827 = vunpack.c.l.b16 %v213
  %v828 = vunpack.c.l.b16 %v214
  %v829 = vunpack.c.l.b16 %v215
  %v830 = vunpack.c.l.b16 %v216
  %v831 = vunpack.c.l.b16 %v217
  %v832 = vunpack.c.l.b16 %v218
  %v833 = vunpack.c.l.b16 %v219
  %v834 = vunpack.c.l.b16 %v220
  %v835 = vunpack.c.l.b16 %v221
  %v836 = vunpack.c.l.b16 %v222
  %v837 = vunpack.c.l.b16 %v223
  %v838 = vunpack.c.l.b16 %v224
  %v839 = vunpack.c.l.b16 %v225
  %v840 = vunpack.c.l.b16 %v226
  %v841 = vunpack.c.l.b16 %v227
  %v842 = vunpack.c.l.b16 %v228
  %v843 = vunpack.c.l.b16 %v229
  %v844 = vunpack.c.l.b16 %v230
  %v845 = vunpack.c.l.b16 %v231
  %v846 = vunpack.c.l.b16 %v232
  %v847 = vunpack.c.l.b16 %v233
  %v848 = vunpack.c.l.b16 %v234
  %v849 = vunpack.c.l.b16 %v235
  %v850 = vunpack.c.l.b16 %v236
  %v851 = vunpack.c.l.b16 %v237
  %v852 = vunpack.c.l.b16 %v238
  %v853 = vunpack.c.l.b16 %v239
  %v854 = vunpack.c.l.b16 %v240
  %v855 = vunpack.c.l.b16 %v241
  %v856 = vunpack.c.l.b16 %v242
  %v857 = vunpack.c.l.b16 %v243
  %v858 = vunpack.c.l.b16 %v244
  %v859 = vunpack.c.l.b16 %v245
  %v860 = vunpack.c.l.b16 %v246
  %v861 = vunpack.c.l.b16 %v247
  %v862 = vunpack.c.l.b16 %v248
  %v863 = vunpack.c.l.b16 %v249
  %v864 = vunpack.c.l.b16 %v250
  %v865 = vunpack.c.l.b16 %v251
  %v866 = vunpack.c.l.b16 %v252
  %v867 = vunpack.c.l.b16 %v253
  %v868 = vunpack.c.l.b16 %v254
  %v869 = vunpack.c.l.b16 %v255
  %v870 = vunpack.c.l.b16 %v256
  %v871 = vunpack.c.l.b16 %v257
  %v872 = vunpack.c.l.b16 %v258
  %v873 = vunpack.c.l.b16 %v259
  %v874 = vunpack.c.l.b16 %v260
  %v875 = vunpack.c.l.b16 %v261
  %v876 = vunpack.c.l.b16 %v262
  %v877 = vunpack.c.l.b16 %v263
  %v878 = vunpack.c.l.b16 %v264
  %v879 = vunpack.c.l.b16 %v265
  %v880 = vunpack.c.l.b16 %v266
  %v881 = vunpack.c.l.b16 %v267
  %v882 = vunpack.c.l.b16 %v268
  %v883 = vunpack.c.l.b16 %v269
  %v884 = vunpack.c.l.b16 %v270
  %v885 = vunpack.c.l.b16 %v271
  %v886 = vunpack.c.l.b16 %v272
  %v887 = vunpack.c.l.b16 %v273
  %v888 = vunpack.c.l.b16 %v274
  %v889 = vunpack.c.l.b16 %v275
  %v890 = vunpack.c.l.b16 %v276
  %v891 = vunpack.c.l.b16 %v277
  %v892 = vunpack.c.l.b16 %v278
  %v893 = vunpack.c.l.b16 %v279
  %v894 = vunpack.c.l.b16 %v280
  %v895 = vunpack.c.l.b16 %v281
  %v896 = vunpack.c.l.b16 %v282
  %v897 = vunpack.c.l.b16 %v283
  %v898 = vunpack.c.l.b16 %v284
  %v899 = vunpack.c.l.b16 %v285
  %v900 = vunpack.c.l.b16 %v286
  %v901 = vunpack.c.l.b16 %v287
  %v902 = vunpack.c.l.b16 %v288
  %v903 = vunpack.c.l.b16 %v289
  %v904 = vunpack.c.l.b16 %v290
  %v905 = vunpack.c.l.b16 %v291
  %v906 = vunpack.c.l.b16 %v292
  %v907 = vunpack.c.l.b16 %v293
  %v908 = vunpack.c.l.b16 %v294
  %v909 = vunpack.c.l.b16 %v295
  %v910 = vunpack.c.l.b16 %v296
  %v911 = vunpack.c.l.b16 %v297
  %v912 = vunpack.c.l.b16 %v298
  %v913 = vunpack.c.l.b16 %v299
  %v914 = vunpack.c.l.b16 %v300
  %v915 = vunpack.c.l.b16 %v301
  %v916 = vunpack.c.l.b16 %v302
  %v917 = vunpack.c.l.b16 %v303
  %v918 = vunpack.c.l.b16 %v304
  %v919 = vunpack.c.l.b16 %v305
  %v920 = vunpack.c.l.b16 %v306
  %v921 = vunpack.c.l.b16 %v307
  %v922 = vunpack.c.l.b16 %v308
  %v923 = vunpack.c.l.b16 %v309
  %v924 = vunpack.c.l.b16 %v310
  %v925 = vunpack.c.l.b16 %v311
  %v926 = vunpack.c.l.b16 %v312
  %v927 = vunpack.c.l.b16 %v313
  %v928 = vunpack.c.l.b16 %v314
  %v929 = vunpack.c.l.b16 %v315
  %v930 = vunpack.c.l.b16 %v316
  %v931 = vunpack.c.l.b16 %v317
  %v932 = vunpack.c.l.b16 %v318
  %v933 = vunpack.c.l.b16 %v319
  %v934 = vunpack.c.l.b16 %v320
  %v935 = vunpack.c.l.b16 %v321
  %v936 = vunpack.c.l.b16 %v322
  %v937 = vunpack.c.l.b16 %v323
  %v938 = vunpack.c.l.b16 %v324
  %v939 = vunpack.c.l.b16 %v325
  %v940 = vunpack.c.l.b16 %v326
  %v941 = vunpack.c.l.b16 %v327
  %v942 = vunpack.c.l.b16 %v328
  %v943 = vunpack.c.l.b16 %v329
  %v944 = vunpack.c.l.b16 %v330
  %v945 = vunpack.c.l.b16 %v331
  %v946 = vunpack.c.l.b16 %v332
  %v947 = vunpack.c.l.b16 %v333
  %v948 = vunpack.c.l.b16 %v334
  %v949 = vunpack.c.l.b16 %v335
  %v950 = vunpack.c.l.b16 %v336
  %v951 = vunpack.c.l.b16 %v337
  %v952 = vunpack.c.l.b16 %v338
  %v953 = vunpack.c.l.b16 %v339
  %v954 = vunpack.c.l.b16 %v340
  %v955 = vunpack.c.l.b16 %v341
  %v956 = vunpack.c.l.b16 %v342
  %v957 = vunpack.c.l.b16 %v343
  %v958 = vunpack.c.l.b16 %v344
  %v959 = vunpack.c.l.b16 %v345
  %v960 = vunpack.c.l.b16 %v346
  %v961 = vunpack.c.l.b16 %v347
  %v962 = vunpack.c.l.b16 %v348
  %v963 = vunpack.c.l.b16 %v349
  %v964 = vunpack.c.l.b16 %v350
  %v965 = vunpack.c.l.b16 %v351
  %v966 = vunpack.c.l.b16 %v352
  %v967 = vunpack.c.l.b16 %v353
  %v968 = vunpack.c.l.b16 %v354
  %v969 = vunpack.c.l.b16 %v355
  %v970 = vunpack.c.l.b16 %v356
  %v971 = vunpack.c.l.b16 %v357
  %v972 = vunpack.c.l.b16 %v358
  %v973 = vunpack.c.l.b16 %v359
  %v974 = vunpack.c.l.b16 %v360
  %v975 = vunpack.c.l.b16 %v361
  %v976 = vunpack.c.l.b16 %v362
  %v977 = vunpack.c.l.b16 %v363
  %v978 = vunpack.c.l.b16 %v364
  %v979 = vunpack.c.l.b16 %v365
  %v980 = vunpack.c.l.b16 %v366
  %v981 = vunpack.c.l.b16 %v367
  %v982 = vunpack.c.l.b16 %v368
  %v983 = vunpack.c.l.b16 %v369
  %v984 = vunpack.c.l.b16 %v370
  %v985 = vunpack.c.l.b16 %v371
  %v986 = vunpack.c.l.b16 %v372
  %v987 = vunpack.c.l.b16 %v373
  %v988 = vunpack.c.l.b16 %v374
  %v989 = vunpack.c.l.b16 %v375
  %v990 = vunpack.c.l.b16 %v376
  %v991 = vunpack.c.l.b16 %v377
  %v992 = vunpack.c.l.b16 %v378
  %v993 = vunpack.c.l.b16 %v379
  %v994 = vunpack.c.l.b16 %v380
  %v995 = vunpack.c.l.b16 %v381
  %v996 = vunpack.c.l.b16 %v382
  %v997 = vunpack.c.l.b16 %v383
  %v998 = vunpack.c.l.b16 %v384
  %v999 = vunpack.c.l.b16 %v385
  %v1000 = vunpack.c.l.b16 %v386
  %v1001 = vunpack.c.l.b16 %v387
  %v1002 = vunpack.c.l.b16 %v388
  %v1003 = vunpack.c.l.b16 %v389
  %v1004 = vunpack.c.l.b16 %v390
  %v1005 = vunpack.c.l.b16 %v391
  %v1006 = vunpack.c.l.b16 %v392
  %v1007 = vunpack.c.l.b16 %v393
  %v1008 = vunpack.c.l.b16 %v394
  %v1009 = vunpack.c.l.b16 %v395
  %v1010 = vunpack.c.l.b16 %v396
  %v1011 = vunpack.c.l.b16 %v397
  %v1012 = vunpack.c.l.b16 %v398
  %v1013 = vunpack.c.l.b16 %v399
  %v1014 = vunpack.c.l.b16 %v400
  %v1015 = vunpack.c.l.b16 %v401
  %v1016 = vunpack.c.l.b16 %v402
  %v1017 = vunpack.c.l.b16 %v403
  %v1018 = vunpack.c.l.b16 %v404
  %v1019 = vunpack.c.l.b16 %v405
  %v1020 = vunpack.c.l.b16 %v406
  %v1021 = vunpack.c.l.b16 %v407
  %v1022 = vunpack.c.l.b16 %v408
  %v1023 = vunpack.c.l.b16 %v409
  %v1024 = vunpack.c.l.b16 %v410
  %v1025 = vunpack.c.l.b16 %v411
  %v1026 = vunpack.c.l.b16 %v412
  %v1027 = vunpack.c.l.b16 %v413
  %v1028 = vunpack.c.l.b16 %v414
  %v1029 = vunpack.c.l.b16 %v415
  %v1030 = vunpack.c.l.b16 %v416
  %v1031 = vunpack.c.l.b16 %v417
  %v1032 = vunpack.c.l.b16 %v418
  %v1033 = vunpack.c.l.b16 %v419
  %v1034 = vunpack.c.l.b16 %v420
  %v1035 = vunpack.c.l.b16 %v421
  %v1036 = vunpack.c.l.b16 %v422
  %v1037 = vunpack.c.l.b16 %v423
  %v1038 = vunpack.c.l.b16 %v424
  %v1039 = vunpack.c.l.b16 %v425
  %v1040 = vunpack.c.l.b16 %v426
  %v1041 = vunpack.c.l.b16 %v427
  %v1042 = vunpack.c.l.b16 %v428
  %v1043 = vunpack.c.l.b16 %v429
  %v1044 = vunpack.c.l.b16 %v430
  %v1045 = vunpack.c.l.b16 %v431
  %v1046 = vunpack.c.l.b16 %v432
  %v1047 = vunpack.c.l.b16 %v433
  %v1048 = vunpack.c.l.b16 %v434
  %v1049 = vunpack.c.l.b16 %v435
  %v1050 = vunpack.c.l.b16 %v436
  %v1051 = vunpack.c.l.b16 %v437
  %v1052 = vunpack.c.l.b16 %v438
  %v1053 = vunpack.c.l.b16 %v439
  %v1054 = vunpack.c.l.b16 %v440
  %v1055 = vunpack.c.l.b16 %v441
  %v1056 = vunpack.c.l.b16 %v442
  %v1057 = vunpack.c.l.b16 %v443
  %v1058 = vunpack.c.l.b16 %v444
  %v1059 = vunpack.c.l.b16 %v445
  %v1060 = vunpack.c.l.b16 %v446
  %v1061 = vunpack.c.l.b16 %v447
  %v1062 = vunpack.c.l.b16 %v448
  %v1063 = vunpack.c.l.b16 %v449
  %v1064 = vunpack.c.l.b16 %v450
  %v1065 = vunpack.c.l.b16 %v451
  %v1066 = vunpack.c.l.b16 %v452
  %v1067 = vunpack.c.l.b16 %v453
  %v1068 = vunpack.c.l.b16 %v454
  %v1069 = vunpack.c.l.b16 %v455
  %v1070 = vunpack.c.l.b16 %v456
  %v1071 = vunpack.c.l.b16 %v457
  %v1072 = vunpack.c.l.b16 %v458
  %v1073 = vunpack.c.l.b16 %v459
  %v1074 = vunpack.c.l.b16 %v460
  %v1075 = vpack.c.b16 %v772, %v771
  %v1076 = vpack.c.b16 %v774, %v773
  %v1077 = vpack.c.b16 %v776, %v775
  %v1078 = vpack.c.b16 %v778, %v777
  %v1079 = vpack.c.b16 %v780, %v779
  %v1080 = vpack.c.b16 %v782, %v781
  %v1081 = vpack.c.b16 %v784, %v783
  %v1082 = vpack.c.b16 %v786, %v785
  %v1083 = vpack.c.b16 %v788, %v787
  %v1084 = vpack.c.b16 %v790, %v789
  %v1085 = vpack.c.b16 %v792, %v791
  %v1086 = vpack.c.b16 %v794, %v793
  %v1087 = vpack.c.b16 %v796, %v795
  %v1088 = vpack.c.b16 %v798, %v797
  %v1089 = vpack.c.b16 %v800, %v799
  %v1090 = vpack.c.b16 %v802, %v801
  %v1091 = vpack.c.b16 %v804, %v803
  %v1092 = vpack.c.b16 %v806, %v805
  %v1093 = vpack.c.b16 %v808, %v807
  %v1094 = vpack.c.b16 %v810, %v809
  %v1095 = vpack.c.b16 %v812, %v811
  %v1096 = vpack.c.b16 %v814, %v813
  %v1097 = vpack.c.b16 %v816, %v815
  %v1098 = vpack.c.b16 %v818, %v817
  %v1099 = vpack.c.b16 %v820, %v819
  %v1100 = vpack.c.b16 %v822, %v821
  %v1101 = vpack.c.b16 %v824, %v823
  %v1102 = vpack.c.b16 %v826, %v825
  %v1103 = vpack.c.b16 %v828, %v827
  %v1104 = vpack.c.b16 %v830, %v829
  %v1105 = vpack.c.b16 %v832, %v831
  %v1106 = vpack.c.b16 %v834, %v833
  %v1107 = vpack.c.b16 %v836, %v835
  %v1108 = vpack.c.b16 %v838, %v837
  %v1109 = vpack.c.b16 %v840, %v839
  %v1110 = vpack.c.b16 %v842, %v841
  %v1111 = vpack.c.b16 %v844, %v843
  %v1112 = vpack.c.b16 %v846, %v845
  %v1113 = vpack.c.b16 %v848, %v847
  %v1114 = vpack.c.b16 %v850, %v849
  %v1115 = vpack.c.b16 %v852, %v851
  %v1116 = vpack.c.b16 %v854, %v853
  %v1117 = vpack.c.b16 %v856, %v855
  %v1118 = vpack.c.b16 %v858, %v857
  %v1119 = vpack.c.b16 %v860, %v859
  %v1120 = vpack.c.b16 %v862, %v861
  %v1121 = vpack.c.b16 %v864, %v863
  %v1122 = vpack.c.b16 %v866, %v865
  %v1123 = vpack.c.b16 %v868, %v867
  %v1124 = vpack.c.b16 %v870, %v869
  %v1125 = vpack.c.b16 %v872, %v871
  %v1126 = vpack.c.b16 %v874, %v873
  %v1127 = vpack.c.b16 %v876, %v875
  %v1128 = vpack.c.b16 %v878, %v877
  %v1129 = vpack.c.b16 %v880, %v879
  %v1130 = vpack.c.b16 %v882, %v881
  %v1131 = vpack.c.b16 %v884, %v883
  %v1132 = vpack.c.b16 %v886, %v885
  %v1133 = vpack.c.b16 %v888, %v887
  %v1134 = vpack.c.b16 %v890, %v889
  %v1135 = vpack.c.b16 %v892, %v891
  %v1136 = vpack.c.b16 %v894, %v893
  %v1137 = vpack.c.b16 %v896, %v895
  %v1138 = vpack.c.b16 %v898, %v897
  %v1139 = vpack.c.b16 %v900, %v899
  %v1140 = vpack.c.b16 %v902, %v901
  %v1141 = vpack.c.b16 %v904, %v903
  %v1142 = vpack.c.b16 %v906, %v905
  %v1143 = vpack.c.b16 %v908, %v907
  %v1144 = vpack.c.b16 %v910, %v909
  %v1145 = vpack.c.b16 %v912, %v911
  %v1146 = vpack.c.b16 %v914, %v913
  %v1147 = vpack.c.b16 %v916, %v915
  %v1148 = vpack.c.b16 %v918, %v917
  %v1149 = vpack.c.b16 %v920, %v919
  %v1150 = vpack.c.b16 %v922, %v921
  %v1151 = vpack.c.b16 %v924, %v923
  %v1152 = vpack.c.b16 %v926, %v925
  %v1153 = vpack.c.b16 %v928, %v927
  %v1154 = vpack.c.b16 %v930, %v929
  %v1155 = vpack.c.b16 %v932, %v931
  %v1156 = vpack.c.b16 %v934, %v933
  %v1157 = vpack.c.b16 %v936, %v935
  %v1158 = vpack.c.b16 %v938, %v937
  %v1159 = vpack.c.b16 %v940, %v939
  %v1160 = vpack.c.b16 %v942, %v941
  %v1161 = vpack.c.b16 %v944, %v943
  %v1162 = vpack.c.b16 %v946, %v945
  %v1163 = vpack.c.b16 %v948, %v947
  %v1164 = vpack.c.b16 %v950, %v949
  %v1165 = vpack.c.b16 %v952, %v951
  %v1166 = vpack.c.b16 %v954, %v953
  %v1167 = vpack.c.b16 %v956, %v955
  %v1168 = vpack.c.b16 %v958, %v957
  %v1169 = vpack.c.b16 %v960, %v959
  %v1170 = vpack.c.b16 %v962, %v961
  %v1171 = vpack.c.b16 %v964, %v963
  %v1172 = vpack.c.b16 %v966, %v965
  %v1173 = vpack.c.b16 %v968, %v967
  %v1174 = vpack.c.b16 %v970, %v969
  %v1175 = vpack.c.b16 %v972, %v971
  %v1176 = vpack.c.b16 %v974, %v973
  %v1177 = vpack.c.b16 %v976, %v975
  %v1178 = vpack.c.b16 %v978, %v977
  %v1179 = vpack.c.b16 %v980, %v979
  %v1180 = vpack.c.b16 %v982, %v981
  %v1181 = vpack.c.b16 %v984, %v983
  %v1182 = vpack.c.b16 %v986, %v985
  %v1183 = vpack.c.b16 %v988, %v987
  %v1184 = vpack.c.b16 %v990, %v989
  %v1185 = vpack.c.b16 %v992, %v991
  %v1186 = vpack.c.b16 %v994, %v993
  %v1187 = vpack.c.b16 %v996, %v995
  %v1188 = vpack.c.b16 %v998, %v997
  %v1189 = vpack.c.b16 %v1000, %v999
  %v1190 = vpack.c.b16 %v1002, %v1001
  %v1191 = vpack.c.b16 %v1004, %v1003
  %v1192 = vpack.c.b16 %v1006, %v1005
  %v1193 = vpack.c.b16 %v1008, %v1007
  %v1194 = vpack.c.b16 %v1010, %v1009
  %v1195 = vpack.c.b16 %v1012, %v1011
  %v1196 = vpack.c.b16 %v1014, %v1013
  %v1197 = vpack.c.b16 %v1016, %v1015
  %v1198 = vpack.c.b16 %v1018, %v1017
  %v1199 = vpack.c.b16 %v1020, %v1019
  %v1200 = vpack.c.b16 %v1022, %v1021
  %v1201 = vpack.c.b16 %v1024, %v1023
  %v1202 = vpack.c.b16 %v1026, %v1025
  %v1203 = vpack.c.b16 %v1028, %v1027
  %v1204 = vpack.c.b16 %v1030, %v1029
  %v1205 = vpack.c.b16 %v1032, %v1031
  %v1206 = vpack.c.b16 %v1034, %v1033
  %v1207 = vpack.c.b16 %v1036, %v1035
  %v1208 = vpack.c.b16 %v1038, %v1037
  %v1209 = vpack.c.b16 %v1040, %v1039
  %v1210 = vpack.c.b16 %v1042, %v1041
  %v1211 = vpack.c.b16 %v1044, %v1043
  %v1212 = vpack.c.b16 %v1046, %v1045
  %v1213 = vpack.c.b16 %v1048, %v1047
  %v1214 = vpack.c.b16 %v1050, %v1049
  %v1215 = vpack.c.b16 %v1052, %v1051
  %v1216 = vpack.c.b16 %v1054, %v1053
  %v1217 = vpack.c.b16 %v1056, %v1055
  %v1218 = vpack.c.b16 %v1058, %v1057
  %v1219 = vpack.c.b16 %v1060, %v1059
  %v1220 = vpack.c.b16 %v1062, %v1061
  %v1221 = vpack.c.b16 %v1064, %v1063
  %v1222 = vpack.c.b16 %v1066, %v1065
  %v1223 = vpack.c.b16 %v1068, %v1067
  %v1224 = vpack.c.b16 %v1070, %v1069
  %v1225 = vpack.c.b16 %v1072, %v1071
  %v1226 = vpack.c.b16 %v1074, %v1073
  %1379 = vmatprep.subr.bf16.mxu0 0
  %1380 = vmatpush1.bf16.msra.mxu0 %v1082
  %1381 = vmatprep.subr.bf16.mxu0 0
  %1382 = vmatpush1.bf16.msra.mxu0 %v1081
  %1383 = vmatprep.subr.bf16.mxu0 0
  %1384 = vmatpush1.bf16.msra.mxu0 %v1080
  %1385 = vmatprep.subr.bf16.mxu0 0
  %1386 = vmatpush1.bf16.msra.mxu0 %v1079
  %1387 = vmatprep.subr.bf16.mxu0 0
  %1388 = vmatpush1.bf16.msra.mxu0 %v1078
  %1389 = vmatprep.subr.bf16.mxu0 0
  %1390 = vmatpush1.bf16.msra.mxu0 %v1077
  %1391 = vmatprep.subr.bf16.mxu0 0
  %1392 = vmatpush1.bf16.msra.mxu0 %v1076
  %1393 = vmatprep.subr.bf16.mxu0 0
  %1394 = vmatpush1.bf16.msra.mxu0 %v1075
  %1395 = vmatprep.subr.bf16.mxu0 0
  %1396 = vmatpush2.bf16.msra.mxu0 %v1090
  %1397 = vmatprep.subr.bf16.mxu0 0
  %1398 = vmatpush2.bf16.msra.mxu0 %v1089
  %1399 = vmatprep.subr.bf16.mxu0 0
  %1400 = vmatpush2.bf16.msra.mxu0 %v1088
  %1401 = vmatprep.subr.bf16.mxu0 0
  %1402 = vmatpush2.bf16.msra.mxu0 %v1087
  %1403 = vmatprep.subr.bf16.mxu0 0
  %1404 = vmatpush2.bf16.msra.mxu0 %v1086
  %1405 = vmatprep.subr.bf16.mxu0 0
  %1406 = vmatpush2.bf16.msra.mxu0 %v1085
  %1407 = vmatprep.subr.bf16.mxu0 0
  %1408 = vmatpush2.bf16.msra.mxu0 %v1084
  %1409 = vmatprep.subr.bf16.mxu0 0
  %1410 = vmatpush2.bf16.msra.mxu0 %v1083
  %1411 = vmatprep.mubr.bf16.mxu0 %v139
  %1412 = vmatmul.mubr.bf16.gmra.mxu0 %v138
  %v1413 = vpop.f32.mrf.mxu0
  %v1414 = vadd.f32 %v465, %v1413
  %v1415 = vpop.f32.mrf.mxu0
  %v1416 = vpop.f32.mrf.mxu0
  %v1417 = vpop.f32.mrf.mxu0
  %1418 = vdwg.mxu0
  %1419 = vmatprep.subr.bf16.mxu0 0
  %1420 = vmatpush1.bf16.msra.mxu0 %v1098
  %1421 = vmatprep.subr.bf16.mxu0 0
  %1422 = vmatpush1.bf16.msra.mxu0 %v1097
  %1423 = vmatprep.subr.bf16.mxu0 0
  %1424 = vmatpush1.bf16.msra.mxu0 %v1096
  %1425 = vmatprep.subr.bf16.mxu0 0
  %1426 = vmatpush1.bf16.msra.mxu0 %v1095
  %1427 = vmatprep.subr.bf16.mxu0 0
  %1428 = vmatpush1.bf16.msra.mxu0 %v1094
  %1429 = vmatprep.subr.bf16.mxu0 0
  %1430 = vmatpush1.bf16.msra.mxu0 %v1093
  %1431 = vmatprep.subr.bf16.mxu0 0
  %1432 = vmatpush1.bf16.msra.mxu0 %v1092
  %1433 = vmatprep.subr.bf16.mxu0 0
  %1434 = vmatpush1.bf16.msra.mxu0 %v1091
  %1435 = vmatprep.subr.bf16.mxu0 0
  %1436 = vmatpush2.bf16.msra.mxu0 %v1106
  %1437 = vmatprep.subr.bf16.mxu0 0
  %1438 = vmatpush2.bf16.msra.mxu0 %v1105
  %1439 = vmatprep.subr.bf16.mxu0 0
  %1440 = vmatpush2.bf16.msra.mxu0 %v1104
  %1441 = vmatprep.subr.bf16.mxu0 0
  %1442 = vmatpush2.bf16.msra.mxu0 %v1103
  %1443 = vmatprep.subr.bf16.mxu0 0
  %1444 = vmatpush2.bf16.msra.mxu0 %v1102
  %1445 = vmatprep.subr.bf16.mxu0 0
  %1446 = vmatpush2.bf16.msra.mxu0 %v1101
  %1447 = vmatprep.subr.bf16.mxu0 0
  %1448 = vmatpush2.bf16.msra.mxu0 %v1100
  %1449 = vmatprep.subr.bf16.mxu0 0
  %1450 = vmatpush2.bf16.msra.mxu0 %v1099
  %1451 = vmatprep.mubr.bf16.mxu0 %v141
  %1452 = vmatmul.mubr.bf16.gmra.mxu0 %v140
  %v1453 = vpop.f32.mrf.mxu0
  %v1454 = vadd.f32 %v1414, %v1453
  %v1455 = vpop.f32.mrf.mxu0
  %v1456 = vpop.f32.mrf.mxu0
  %v1457 = vpop.f32.mrf.mxu0
  %1458 = vdwg.mxu0
  %1459 = vmatprep.subr.bf16.mxu0 0
  %1460 = vmatpush1.bf16.msra.mxu0 %v1114
  %1461 = vmatprep.subr.bf16.mxu0 0
  %1462 = vmatpush1.bf16.msra.mxu0 %v1113
  %1463 = vmatprep.subr.bf16.mxu0 0
  %1464 = vmatpush1.bf16.msra.mxu0 %v1112
  %1465 = vmatprep.subr.bf16.mxu0 0
  %1466 = vmatpush1.bf16.msra.mxu0 %v1111
  %1467 = vmatprep.subr.bf16.mxu0 0
  %1468 = vmatpush1.bf16.msra.mxu0 %v1110
  %1469 = vmatprep.subr.bf16.mxu0 0
  %1470 = vmatpush1.bf16.msra.mxu0 %v1109
  %1471 = vmatprep.subr.bf16.mxu0 0
  %1472 = vmatpush1.bf16.msra.mxu0 %v1108
  %1473 = vmatprep.subr.bf16.mxu0 0
  %1474 = vmatpush1.bf16.msra.mxu0 %v1107
  %1475 = vmatprep.subr.bf16.mxu0 0
  %1476 = vmatpush2.bf16.msra.mxu0 %v1122
  %1477 = vmatprep.subr.bf16.mxu0 0
  %1478 = vmatpush2.bf16.msra.mxu0 %v1121
  %1479 = vmatprep.subr.bf16.mxu0 0
  %1480 = vmatpush2.bf16.msra.mxu0 %v1120
  %1481 = vmatprep.subr.bf16.mxu0 0
  %1482 = vmatpush2.bf16.msra.mxu0 %v1119
  %1483 = vmatprep.subr.bf16.mxu0 0
  %1484 = vmatpush2.bf16.msra.mxu0 %v1118
  %1485 = vmatprep.subr.bf16.mxu0 0
  %1486 = vmatpush2.bf16.msra.mxu0 %v1117
  %1487 = vmatprep.subr.bf16.mxu0 0
  %1488 = vmatpush2.bf16.msra.mxu0 %v1116
  %1489 = vmatprep.subr.bf16.mxu0 0
  %1490 = vmatpush2.bf16.msra.mxu0 %v1115
  %1491 = vmatprep.mubr.bf16.mxu0 %v143
  %1492 = vmatmul.mubr.bf16.gmra.mxu0 %v142
  %v1493 = vpop.f32.mrf.mxu0
  %v1494 = vadd.f32 %v1454, %v1493
  %v1495 = vpop.f32.mrf.mxu0
  %v1496 = vpop.f32.mrf.mxu0
  %v1497 = vpop.f32.mrf.mxu0
  %1498 = vdwg.mxu0
  %1499 = vmatprep.subr.bf16.mxu0 0
  %1500 = vmatpush1.bf16.msra.mxu0 %v1130
  %1501 = vmatprep.subr.bf16.mxu0 0
  %1502 = vmatpush1.bf16.msra.mxu0 %v1129
  %1503 = vmatprep.subr.bf16.mxu0 0
  %1504 = vmatpush1.bf16.msra.mxu0 %v1128
  %1505 = vmatprep.subr.bf16.mxu0 0
  %1506 = vmatpush1.bf16.msra.mxu0 %v1127
  %1507 = vmatprep.subr.bf16.mxu0 0
  %1508 = vmatpush1.bf16.msra.mxu0 %v1126
  %1509 = vmatprep.subr.bf16.mxu0 0
  %1510 = vmatpush1.bf16.msra.mxu0 %v1125
  %1511 = vmatprep.subr.bf16.mxu0 0
  %1512 = vmatpush1.bf16.msra.mxu0 %v1124
  %1513 = vmatprep.subr.bf16.mxu0 0
  %1514 = vmatpush1.bf16.msra.mxu0 %v1123
  %1515 = vmatprep.subr.bf16.mxu0 0
  %1516 = vmatpush2.bf16.msra.mxu0 %v1138
  %1517 = vmatprep.subr.bf16.mxu0 0
  %1518 = vmatpush2.bf16.msra.mxu0 %v1137
  %1519 = vmatprep.subr.bf16.mxu0 0
  %1520 = vmatpush2.bf16.msra.mxu0 %v1136
  %1521 = vmatprep.subr.bf16.mxu0 0
  %1522 = vmatpush2.bf16.msra.mxu0 %v1135
  %1523 = vmatprep.subr.bf16.mxu0 0
  %1524 = vmatpush2.bf16.msra.mxu0 %v1134
  %1525 = vmatprep.subr.bf16.mxu0 0
  %1526 = vmatpush2.bf16.msra.mxu0 %v1133
  %1527 = vmatprep.subr.bf16.mxu0 0
  %1528 = vmatpush2.bf16.msra.mxu0 %v1132
  %1529 = vmatprep.subr.bf16.mxu0 0
  %1530 = vmatpush2.bf16.msra.mxu0 %v1131
  %1531 = vmatprep.mubr.bf16.mxu0 %v145
  %1532 = vmatmul.mubr.bf16.gmra.mxu0 %v144
  %v1533 = vpop.f32.mrf.mxu0
  %v1534 = vadd.f32 %v1494, %v1533
  %v1535 = vpop.f32.mrf.mxu0
  %v1536 = vpop.f32.mrf.mxu0
  %v1537 = vpop.f32.mrf.mxu0
  %1538 = vdwg.mxu0
  %1539 = vmatprep.subr.bf16.mxu0 0
  %1540 = vmatpush1.bf16.msra.mxu0 %v1146
  %1541 = vmatprep.subr.bf16.mxu0 0
  %1542 = vmatpush1.bf16.msra.mxu0 %v1145
  %1543 = vmatprep.subr.bf16.mxu0 0
  %1544 = vmatpush1.bf16.msra.mxu0 %v1144
  %1545 = vmatprep.subr.bf16.mxu0 0
  %1546 = vmatpush1.bf16.msra.mxu0 %v1143
  %1547 = vmatprep.subr.bf16.mxu0 0
  %1548 = vmatpush1.bf16.msra.mxu0 %v1142
  %1549 = vmatprep.subr.bf16.mxu0 0
  %1550 = vmatpush1.bf16.msra.mxu0 %v1141
  %1551 = vmatprep.subr.bf16.mxu0 0
  %1552 = vmatpush1.bf16.msra.mxu0 %v1140
  %1553 = vmatprep.subr.bf16.mxu0 0
  %1554 = vmatpush1.bf16.msra.mxu0 %v1139
  %1555 = vmatprep.subr.bf16.mxu0 0
  %1556 = vmatpush2.bf16.msra.mxu0 %v1154
  %1557 = vmatprep.subr.bf16.mxu0 0
  %1558 = vmatpush2.bf16.msra.mxu0 %v1153
  %1559 = vmatprep.subr.bf16.mxu0 0
  %1560 = vmatpush2.bf16.msra.mxu0 %v1152
  %1561 = vmatprep.subr.bf16.mxu0 0
  %1562 = vmatpush2.bf16.msra.mxu0 %v1151
  %1563 = vmatprep.subr.bf16.mxu0 0
  %1564 = vmatpush2.bf16.msra.mxu0 %v1150
  %1565 = vmatprep.subr.bf16.mxu0 0
  %1566 = vmatpush2.bf16.msra.mxu0 %v1149
  %1567 = vmatprep.subr.bf16.mxu0 0
  %1568 = vmatpush2.bf16.msra.mxu0 %v1148
  %1569 = vmatprep.subr.bf16.mxu0 0
  %1570 = vmatpush2.bf16.msra.mxu0 %v1147
  %1571 = vmatprep.mubr.bf16.mxu0 %v147
  %1572 = vmatmul.mubr.bf16.gmra.mxu0 %v146
  %v1573 = vpop.f32.mrf.mxu0
  %v1574 = vadd.f32 %v1534, %v1573
  %v1575 = vpop.f32.mrf.mxu0
  %v1576 = vpop.f32.mrf.mxu0
  %v1577 = vpop.f32.mrf.mxu0
  %1578 = vdwg.mxu0
  %1579 = vmatprep.subr.bf16.mxu0 0
  %1580 = vmatpush1.bf16.msra.mxu0 %v1162
  %1581 = vmatprep.subr.bf16.mxu0 0
  %1582 = vmatpush1.bf16.msra.mxu0 %v1161
  %1583 = vmatprep.subr.bf16.mxu0 0
  %1584 = vmatpush1.bf16.msra.mxu0 %v1160
  %1585 = vmatprep.subr.bf16.mxu0 0
  %1586 = vmatpush1.bf16.msra.mxu0 %v1159
  %1587 = vmatprep.subr.bf16.mxu0 0
  %1588 = vmatpush1.bf16.msra.mxu0 %v1158
  %1589 = vmatprep.subr.bf16.mxu0 0
  %1590 = vmatpush1.bf16.msra.mxu0 %v1157
  %1591 = vmatprep.subr.bf16.mxu0 0
  %1592 = vmatpush1.bf16.msra.mxu0 %v1156
  %1593 = vmatprep.subr.bf16.mxu0 0
  %1594 = vmatpush1.bf16.msra.mxu0 %v1155
  %1595 = vmatprep.subr.bf16.mxu0 0
  %1596 = vmatpush2.bf16.msra.mxu0 %v1170
  %1597 = vmatprep.subr.bf16.mxu0 0
  %1598 = vmatpush2.bf16.msra.mxu0 %v1169
  %1599 = vmatprep.subr.bf16.mxu0 0
  %1600 = vmatpush2.bf16.msra.mxu0 %v1168
  %1601 = vmatprep.subr.bf16.mxu0 0
  %1602 = vmatpush2.bf16.msra.mxu0 %v1167
  %1603 = vmatprep.subr.bf16.mxu0 0
  %1604 = vmatpush2.bf16.msra.mxu0 %v1166
  %1605 = vmatprep.subr.bf16.mxu0 0
  %1606 = vmatpush2.bf16.msra.mxu0 %v1165
  %1607 = vmatprep.subr.bf16.mxu0 0
  %1608 = vmatpush2.bf16.msra.mxu0 %v1164
  %1609 = vmatprep.subr.bf16.mxu0 0
  %1610 = vmatpush2.bf16.msra.mxu0 %v1163
  %1611 = vmatprep.mubr.bf16.mxu0 %v149
  %1612 = vmatmul.mubr.bf16.gmra.mxu0 %v148
  %v1613 = vpop.f32.mrf.mxu0
  %v1614 = vadd.f32 %v1574, %v1613
  %v1615 = vpop.f32.mrf.mxu0
  %v1616 = vpop.f32.mrf.mxu0
  %v1617 = vpop.f32.mrf.mxu0
  %1618 = vdwg.mxu0
  %1619 = vmatprep.subr.bf16.mxu0 0
  %1620 = vmatpush1.bf16.msra.mxu0 %v1178
  %1621 = vmatprep.subr.bf16.mxu0 0
  %1622 = vmatpush1.bf16.msra.mxu0 %v1177
  %1623 = vmatprep.subr.bf16.mxu0 0
  %1624 = vmatpush1.bf16.msra.mxu0 %v1176
  %1625 = vmatprep.subr.bf16.mxu0 0
  %1626 = vmatpush1.bf16.msra.mxu0 %v1175
  %1627 = vmatprep.subr.bf16.mxu0 0
  %1628 = vmatpush1.bf16.msra.mxu0 %v1174
  %1629 = vmatprep.subr.bf16.mxu0 0
  %1630 = vmatpush1.bf16.msra.mxu0 %v1173
  %1631 = vmatprep.subr.bf16.mxu0 0
  %1632 = vmatpush1.bf16.msra.mxu0 %v1172
  %1633 = vmatprep.subr.bf16.mxu0 0
  %1634 = vmatpush1.bf16.msra.mxu0 %v1171
  %1635 = vmatprep.subr.bf16.mxu0 0
  %1636 = vmatpush2.bf16.msra.mxu0 %v1186
  %1637 = vmatprep.subr.bf16.mxu0 0
  %1638 = vmatpush2.bf16.msra.mxu0 %v1185
  %1639 = vmatprep.subr.bf16.mxu0 0
  %1640 = vmatpush2.bf16.msra.mxu0 %v1184
  %1641 = vmatprep.subr.bf16.mxu0 0
  %1642 = vmatpush2.bf16.msra.mxu0 %v1183
  %1643 = vmatprep.subr.bf16.mxu0 0
  %1644 = vmatpush2.bf16.msra.mxu0 %v1182
  %1645 = vmatprep.subr.bf16.mxu0 0
  %1646 = vmatpush2.bf16.msra.mxu0 %v1181
  %1647 = vmatprep.subr.bf16.mxu0 0
  %1648 = vmatpush2.bf16.msra.mxu0 %v1180
  %1649 = vmatprep.subr.bf16.mxu0 0
  %1650 = vmatpush2.bf16.msra.mxu0 %v1179
  %1651 = vmatprep.mubr.bf16.mxu0 %v151
  %1652 = vmatmul.mubr.bf16.gmra.mxu0 %v150
  %v1653 = vpop.f32.mrf.mxu0
  %v1654 = vadd.f32 %v1614, %v1653
  %v1655 = vpop.f32.mrf.mxu0
  %v1656 = vpop.f32.mrf.mxu0
  %v1657 = vpop.f32.mrf.mxu0
  %1658 = vdwg.mxu0
  %1659 = vmatprep.subr.bf16.mxu0 0
  %1660 = vmatpush1.bf16.msra.mxu0 %v1194
  %1661 = vmatprep.subr.bf16.mxu0 0
  %1662 = vmatpush1.bf16.msra.mxu0 %v1193
  %1663 = vmatprep.subr.bf16.mxu0 0
  %1664 = vmatpush1.bf16.msra.mxu0 %v1192
  %1665 = vmatprep.subr.bf16.mxu0 0
  %1666 = vmatpush1.bf16.msra.mxu0 %v1191
  %1667 = vmatprep.subr.bf16.mxu0 0
  %1668 = vmatpush1.bf16.msra.mxu0 %v1190
  %1669 = vmatprep.subr.bf16.mxu0 0
  %1670 = vmatpush1.bf16.msra.mxu0 %v1189
  %1671 = vmatprep.subr.bf16.mxu0 0
  %1672 = vmatpush1.bf16.msra.mxu0 %v1188
  %1673 = vmatprep.subr.bf16.mxu0 0
  %1674 = vmatpush1.bf16.msra.mxu0 %v1187
  %1675 = vmatprep.subr.bf16.mxu0 0
  %1676 = vmatpush2.bf16.msra.mxu0 %v1202
  %1677 = vmatprep.subr.bf16.mxu0 0
  %1678 = vmatpush2.bf16.msra.mxu0 %v1201
  %1679 = vmatprep.subr.bf16.mxu0 0
  %1680 = vmatpush2.bf16.msra.mxu0 %v1200
  %1681 = vmatprep.subr.bf16.mxu0 0
  %1682 = vmatpush2.bf16.msra.mxu0 %v1199
  %1683 = vmatprep.subr.bf16.mxu0 0
  %1684 = vmatpush2.bf16.msra.mxu0 %v1198
  %1685 = vmatprep.subr.bf16.mxu0 0
  %1686 = vmatpush2.bf16.msra.mxu0 %v1197
  %1687 = vmatprep.subr.bf16.mxu0 0
  %1688 = vmatpush2.bf16.msra.mxu0 %v1196
  %1689 = vmatprep.subr.bf16.mxu0 0
  %1690 = vmatpush2.bf16.msra.mxu0 %v1195
  %1691 = vmatprep.mubr.bf16.mxu0 %v153
  %1692 = vmatmul.mubr.bf16.gmra.mxu0 %v152
  %v1693 = vpop.f32.mrf.mxu0
  %v1694 = vadd.f32 %v1654, %v1693
  %v1695 = vpop.f32.mrf.mxu0
  %v1696 = vpop.f32.mrf.mxu0
  %v1697 = vpop.f32.mrf.mxu0
  %1698 = vdwg.mxu0
  %1699 = vmatprep.subr.bf16.mxu0 0
  %1700 = vmatpush1.bf16.msra.mxu0 %v1210
  %1701 = vmatprep.subr.bf16.mxu0 0
  %1702 = vmatpush1.bf16.msra.mxu0 %v1209
  %1703 = vmatprep.subr.bf16.mxu0 0
  %1704 = vmatpush1.bf16.msra.mxu0 %v1208
  %1705 = vmatprep.subr.bf16.mxu0 0
  %1706 = vmatpush1.bf16.msra.mxu0 %v1207
  %1707 = vmatprep.subr.bf16.mxu0 0
  %1708 = vmatpush1.bf16.msra.mxu0 %v1206
  %1709 = vmatprep.subr.bf16.mxu0 0
  %1710 = vmatpush1.bf16.msra.mxu0 %v1205
  %1711 = vmatprep.subr.bf16.mxu0 0
  %1712 = vmatpush1.bf16.msra.mxu0 %v1204
  %1713 = vmatprep.subr.bf16.mxu0 0
  %1714 = vmatpush1.bf16.msra.mxu0 %v1203
  %1715 = vmatprep.subr.bf16.mxu0 0
  %1716 = vmatpush2.bf16.msra.mxu0 %v1218
  %1717 = vmatprep.subr.bf16.mxu0 0
  %1718 = vmatpush2.bf16.msra.mxu0 %v1217
  %1719 = vmatprep.subr.bf16.mxu0 0
  %1720 = vmatpush2.bf16.msra.mxu0 %v1216
  %1721 = vmatprep.subr.bf16.mxu0 0
  %1722 = vmatpush2.bf16.msra.mxu0 %v1215
  %1723 = vmatprep.subr.bf16.mxu0 0
  %1724 = vmatpush2.bf16.msra.mxu0 %v1214
  %1725 = vmatprep.subr.bf16.mxu0 0
  %1726 = vmatpush2.bf16.msra.mxu0 %v1213
  %1727 = vmatprep.subr.bf16.mxu0 0
  %1728 = vmatpush2.bf16.msra.mxu0 %v1212
  %1729 = vmatprep.subr.bf16.mxu0 0
  %1730 = vmatpush2.bf16.msra.mxu0 %v1211
  %1731 = vmatprep.mubr.bf16.mxu0 %v155
  %1732 = vmatmul.mubr.bf16.gmra.mxu0 %v154
  %v1733 = vpop.f32.mrf.mxu0
  %v1734 = vadd.f32 %v1694, %v1733
  %v1735 = vpop.f32.mrf.mxu0
  %v1736 = vpop.f32.mrf.mxu0
  %v1737 = vpop.f32.mrf.mxu0
  %1738 = vdwg.mxu0
  %1739 = vmatprep.subr.bf16.mxu0 0
  %1740 = vmatpush1.bf16.msra.mxu0 %v1226
  %1741 = vmatprep.subr.bf16.mxu0 0
  %1742 = vmatpush1.bf16.msra.mxu0 %v1225
  %1743 = vmatprep.subr.bf16.mxu0 0
  %1744 = vmatpush1.bf16.msra.mxu0 %v1224
  %1745 = vmatprep.subr.bf16.mxu0 0
  %1746 = vmatpush1.bf16.msra.mxu0 %v1223
  %1747 = vmatprep.subr.bf16.mxu0 0
  %1748 = vmatpush1.bf16.msra.mxu0 %v1222
  %1749 = vmatprep.subr.bf16.mxu0 0
  %1750 = vmatpush1.bf16.msra.mxu0 %v1221
  %1751 = vmatprep.subr.bf16.mxu0 0
  %1752 = vmatpush1.bf16.msra.mxu0 %v1220
  %1753 = vmatprep.subr.bf16.mxu0 0
  %1754 = vmatpush1.bf16.msra.mxu0 %v1219
  %1755 = vmatprep.subr.bf16.mxu0 0
  %1756 = vmatpush2.bf16.msra.mxu0 0
  %1757 = vmatprep.subr.bf16.mxu0 0
  %1758 = vmatpush2.bf16.msra.mxu0 0
  %1759 = vmatprep.subr.bf16.mxu0 0
  %1760 = vmatpush2.bf16.msra.mxu0 0
  %1761 = vmatprep.subr.bf16.mxu0 0
  %1762 = vmatpush2.bf16.msra.mxu0 0
  %1763 = vmatprep.subr.bf16.mxu0 0
  %1764 = vmatpush2.bf16.msra.mxu0 0
  %1765 = vmatprep.subr.bf16.mxu0 0
  %1766 = vmatpush2.bf16.msra.mxu0 0
  %1767 = vmatprep.subr.bf16.mxu0 0
  %1768 = vmatpush2.bf16.msra.mxu0 0
  %1769 = vmatprep.subr.bf16.mxu0 0
  %1770 = vmatpush2.bf16.msra.mxu0 0
  %1771 = vmatprep.mubr.bf16.mxu0 0
  %1772 = vmatmul.mubr.bf16.gmra.mxu0 %v156
  %v1773 = vpop.f32.mrf.mxu0
  %v1774 = vadd.f32 %v1734, %v1773
  %v1775 = vpop.f32.mrf.mxu0
  %v1776 = vpop.f32.mrf.mxu0
  %v1777 = vpop.f32.mrf.mxu0
  %1778 = vdwg.mxu0
  %v1779 = vld [vmem:[%s2] sm:$0xff]
  %v1780 = vld [vmem:[%s2 + $0x8] sm:$0xff]
  %v1781 = vld [vmem:[%s2 + $0x10] sm:$0xff]
  %v1782 = vld [vmem:[%s2 + $0x18] sm:$0xff]
  %1783 = vrot.lane.b32.xlu0 %v465, 96
  %v1784 = vpop.permute.xlu0 %1783
  %vm1786 = vcmask 261120
  %v1788 = vsel %vm1786, %v1774, 0
  %1790 = vmatprep.subr.mxu0 0.0
  %1791 = vmatpush1.msra.mxu0 0.0
  %1792 = vmatprep.subr.mxu0 0.0
  %1793 = vmatpush1.msra.mxu0 0.0
  %1794 = vmatprep.subr.mxu0 0.0
  %1795 = vmatpush1.msra.mxu0 0.0
  %1796 = vmatprep.subr.mxu0 0.0
  %1797 = vmatpush1.msra.mxu0 0.0
  %1798 = vmatprep.subr.mxu0 0.0
  %1799 = vmatpush1.msra.mxu0 0.0
  %1800 = vmatprep.subr.mxu0 0.0
  %1801 = vmatpush1.msra.mxu0 0.0
  %1802 = vmatprep.subr.mxu0 0.0
  %1803 = vmatpush1.msra.mxu0 0.0
  %1804 = vmatprep.subr.mxu0 0.0
  %1805 = vmatpush1.msra.mxu0 0.0
  %1806 = vmatprep.subr.mxu0 0.0
  %1807 = vmatpush1.msra.mxu0 0.0
  %1808 = vmatprep.subr.mxu0 0.0
  %1809 = vmatpush1.msra.mxu0 0.0
  %1810 = vmatprep.subr.mxu0 0.0
  %1811 = vmatpush1.msra.mxu0 0.0
  %1812 = vmatprep.subr.mxu0 0.0
  %1813 = vmatpush1.msra.mxu0 0.0
  %1814 = vmatprep.subr.mxu0 0.0
  %1815 = vmatpush1.msra.mxu0 %v1782
  %1816 = vmatprep.subr.mxu0 0.0
  %1817 = vmatpush1.msra.mxu0 %v1781
  %1818 = vmatprep.subr.mxu0 0.0
  %1819 = vmatpush1.msra.mxu0 %v1780
  %1820 = vmatprep.subr.mxu0 0.0
  %1821 = vmatpush1.msra.mxu0 %v1779
  %1822 = vmatprep.subr.mxu0 0.0
  %1823 = vmatpush2.msra.mxu0 0.0
  %1824 = vmatprep.subr.mxu0 0.0
  %1825 = vmatpush2.msra.mxu0 0.0
  %1826 = vmatprep.subr.mxu0 0.0
  %1827 = vmatpush2.msra.mxu0 0.0
  %1828 = vmatprep.subr.mxu0 0.0
  %1829 = vmatpush2.msra.mxu0 0.0
  %1830 = vmatprep.subr.mxu0 0.0
  %1831 = vmatpush2.msra.mxu0 0.0
  %1832 = vmatprep.subr.mxu0 0.0
  %1833 = vmatpush2.msra.mxu0 0.0
  %1834 = vmatprep.subr.mxu0 0.0
  %1835 = vmatpush2.msra.mxu0 0.0
  %1836 = vmatprep.subr.mxu0 0.0
  %1837 = vmatpush2.msra.mxu0 0.0
  %1838 = vmatprep.subr.mxu0 0.0
  %1839 = vmatpush2.msra.mxu0 0.0
  %1840 = vmatprep.subr.mxu0 0.0
  %1841 = vmatpush2.msra.mxu0 0.0
  %1842 = vmatprep.subr.mxu0 0.0
  %1843 = vmatpush2.msra.mxu0 0.0
  %1844 = vmatprep.subr.mxu0 0.0
  %1845 = vmatpush2.msra.mxu0 0.0
  %1846 = vmatprep.subr.mxu0 0.0
  %1847 = vmatpush2.msra.mxu0 0.0
  %1848 = vmatprep.subr.mxu0 0.0
  %1849 = vmatpush2.msra.mxu0 0.0
  %1850 = vmatprep.subr.mxu0 0.0
  %1851 = vmatpush2.msra.mxu0 0.0
  %1852 = vmatprep.subr.mxu0 0.0
  %1853 = vmatpush2.msra.mxu0 0.0
  %1854 = vmatprep.mubr.f32.mxu0 0.0
  %1855 = vmatmul.mubr.f32.gmra.mxu0 %v1788
  %v1856 = vpop.f32.mrf.mxu0
  %v1857 = vadd.f32 %v1784, %v1856
  %v1858 = vpop.f32.mrf.mxu0
  %1859 = vdwg.mxu0
  %v1860 = vmax.f32 %v1857, 0.0
  %v1861 = vmin.f32 %v1857, 0.0
  %1862 = vset.pattern.permute.xlu0 96
  %1863 = vperm.xlu0 %1862, %v465
  %v1864 = vpop.permute.xlu0 %1863
  %v1866 = vmul.f32 %v1864, %v1861
  %v1867 = vadd.f32 %v1860, %v1866
  %v1868 = vld [vmem:[%s3] sm:$0xff]
  %1869 = vrot.lane.b32.xlu0 %v465, 64
  %v1870 = vpop.permute.xlu0 %1869
  %vm1872 = vcmask 64512
  %v1874 = vsel %vm1872, %v1867, 0
  %1876 = vmatprep.subr.mxu0 0.0
  %1877 = vmatpush1.msra.mxu0 0.0
  %1878 = vmatprep.subr.mxu0 0.0
  %1879 = vmatpush1.msra.mxu0 0.0
  %1880 = vmatprep.subr.mxu0 0.0
  %1881 = vmatpush1.msra.mxu0 0.0
  %1882 = vmatprep.subr.mxu0 0.0
  %1883 = vmatpush1.msra.mxu0 0.0
  %1884 = vmatprep.subr.mxu0 0.0
  %1885 = vmatpush1.msra.mxu0 0.0
  %1886 = vmatprep.subr.mxu0 0.0
  %1887 = vmatpush1.msra.mxu0 0.0
  %1888 = vmatprep.subr.mxu0 0.0
  %1889 = vmatpush1.msra.mxu0 0.0
  %1890 = vmatprep.subr.mxu0 0.0
  %1891 = vmatpush1.msra.mxu0 0.0
  %1892 = vmatprep.subr.mxu0 0.0
  %1893 = vmatpush1.msra.mxu0 0.0
  %1894 = vmatprep.subr.mxu0 0.0
  %1895 = vmatpush1.msra.mxu0 0.0
  %1896 = vmatprep.subr.mxu0 0.0
  %1897 = vmatpush1.msra.mxu0 0.0
  %1898 = vmatprep.subr.mxu0 0.0
  %1899 = vmatpush1.msra.mxu0 0.0
  %1900 = vmatprep.subr.mxu0 0.0
  %1901 = vmatpush1.msra.mxu0 0.0
  %1902 = vmatprep.subr.mxu0 0.0
  %1903 = vmatpush1.msra.mxu0 0.0
  %1904 = vmatprep.subr.mxu0 0.0
  %1905 = vmatpush1.msra.mxu0 0.0
  %1906 = vmatprep.subr.mxu0 0.0
  %1907 = vmatpush1.msra.mxu0 %v1868
  %1908 = vmatprep.subr.mxu0 0.0
  %1909 = vmatpush2.msra.mxu0 0.0
  %1910 = vmatprep.subr.mxu0 0.0
  %1911 = vmatpush2.msra.mxu0 0.0
  %1912 = vmatprep.subr.mxu0 0.0
  %1913 = vmatpush2.msra.mxu0 0.0
  %1914 = vmatprep.subr.mxu0 0.0
  %1915 = vmatpush2.msra.mxu0 0.0
  %1916 = vmatprep.subr.mxu0 0.0
  %1917 = vmatpush2.msra.mxu0 0.0
  %1918 = vmatprep.subr.mxu0 0.0
  %1919 = vmatpush2.msra.mxu0 0.0
  %1920 = vmatprep.subr.mxu0 0.0
  %1921 = vmatpush2.msra.mxu0 0.0
  %1922 = vmatprep.subr.mxu0 0.0
  %1923 = vmatpush2.msra.mxu0 0.0
  %1924 = vmatprep.subr.mxu0 0.0
  %1925 = vmatpush2.msra.mxu0 0.0
  %1926 = vmatprep.subr.mxu0 0.0
  %1927 = vmatpush2.msra.mxu0 0.0
  %1928 = vmatprep.subr.mxu0 0.0
  %1929 = vmatpush2.msra.mxu0 0.0
  %1930 = vmatprep.subr.mxu0 0.0
  %1931 = vmatpush2.msra.mxu0 0.0
  %1932 = vmatprep.subr.mxu0 0.0
  %1933 = vmatpush2.msra.mxu0 0.0
  %1934 = vmatprep.subr.mxu0 0.0
  %1935 = vmatpush2.msra.mxu0 0.0
  %1936 = vmatprep.subr.mxu0 0.0
  %1937 = vmatpush2.msra.mxu0 0.0
  %1938 = vmatprep.subr.mxu0 0.0
  %1939 = vmatpush2.msra.mxu0 0.0
  %1940 = vmatprep.mubr.f32.mxu0 0.0
  %1941 = vmatmul.mubr.f32.gmra.mxu0 %v1874
  %v1942 = vpop.f32.mrf.mxu0
  %v1943 = vadd.f32 %v1870, %v1942
  %v1944 = vpop.f32.mrf.mxu0
  %1945 = vdwg.mxu0
  %v1946 = vxor.u32 %v1943, 2147483648
  %v1947 = vmul.f32 %v1946, 1.442695
  %v1948 = vpow.pop %v1947
  %v1949 = vadd.f32 %v1948, 1.0
  %v1950 = vrcp.pop %v1949
  %v1951 = vmul.f32 1.0, %v1950
  %v1952 = vpack.c.bf16 %v1951, %v1951
  %v1953 = vld [vmem:[%s4] sm:$0xff]
  %v1954 = vld [vmem:[%s4 + $0x8] sm:$0xff]
  %v1955 = vld [vmem:[%s4 + $0x10] sm:$0xff]
  %v1956 = vld [vmem:[%s4 + $0x18] sm:$0xff]
  %v1957 = vld [vmem:[%s4 + $0x20] sm:$0xff]
  %v1958 = vld [vmem:[%s4 + $0x28] sm:$0xff]
  %v1959 = vld [vmem:[%s4 + $0x30] sm:$0xff]
  %v1960 = vld [vmem:[%s4 + $0x38] sm:$0xff]
  %v1961 = vld [vmem:[%s4 + $0x40] sm:$0xff]
  %v1962 = vld [vmem:[%s4 + $0x48] sm:$0xf]
  %v1963 = vld [vmem:[%s4 + $0x4c] sm:$0xff]
  %v1964 = vld [vmem:[%s4 + $0x54] sm:$0xff]
  %v1965 = vld [vmem:[%s4 + $0x5c] sm:$0xff]
  %v1966 = vld [vmem:[%s4 + $0x64] sm:$0xff]
  %v1967 = vld [vmem:[%s4 + $0x6c] sm:$0xff]
  %v1968 = vld [vmem:[%s4 + $0x74] sm:$0xff]
  %v1969 = vld [vmem:[%s4 + $0x7c] sm:$0xff]
  %v1970 = vld [vmem:[%s4 + $0x84] sm:$0xff]
  %v1971 = vld [vmem:[%s4 + $0x8c] sm:$0xff]
  %v1972 = vld [vmem:[%s4 + $0x94] sm:$0xf]
  %v1973 = vld [vmem:[%s4 + $0x98] sm:$0xff]
  %v1974 = vld [vmem:[%s4 + $0xa0] sm:$0xff]
  %v1975 = vld [vmem:[%s4 + $0xa8] sm:$0xff]
  %v1976 = vld [vmem:[%s4 + $0xb0] sm:$0xff]
  %v1977 = vld [vmem:[%s4 + $0xb8] sm:$0xff]
  %v1978 = vld [vmem:[%s4 + $0xc0] sm:$0xff]
  %v1979 = vld [vmem:[%s4 + $0xc8] sm:$0xff]
  %v1980 = vld [vmem:[%s4 + $0xd0] sm:$0xff]
  %v1981 = vld [vmem:[%s4 + $0xd8] sm:$0xff]
  %v1982 = vld [vmem:[%s4 + $0xe0] sm:$0xf]
  %v1983 = vld [vmem:[%s4 + $0xe4] sm:$0xff]
  %v1984 = vld [vmem:[%s4 + $0xec] sm:$0xff]
  %v1985 = vld [vmem:[%s4 + $0xf4] sm:$0xff]
  %v1986 = vld [vmem:[%s4 + $0xfc] sm:$0xff]
  %v1987 = vld [vmem:[%s4 + $0x104] sm:$0xff]
  %v1988 = vld [vmem:[%s4 + $0x10c] sm:$0xff]
  %v1989 = vld [vmem:[%s4 + $0x114] sm:$0xff]
  %v1990 = vld [vmem:[%s4 + $0x11c] sm:$0xff]
  %v1991 = vld [vmem:[%s4 + $0x124] sm:$0xff]
  %v1992 = vld [vmem:[%s4 + $0x12c] sm:$0xf]
  %v2033 = vunpack.c.l.b16 %v1953
  %v2034 = vunpack.c.h.b16 %v1953
  %v2035 = vunpack.c.l.b16 %v1954
  %v2036 = vunpack.c.h.b16 %v1954
  %v2037 = vunpack.c.l.b16 %v1955
  %v2038 = vunpack.c.h.b16 %v1955
  %v2039 = vunpack.c.l.b16 %v1956
  %v2040 = vunpack.c.h.b16 %v1956
  %v2041 = vunpack.c.l.b16 %v1957
  %v2042 = vunpack.c.h.b16 %v1957
  %v2043 = vunpack.c.l.b16 %v1958
  %v2044 = vunpack.c.h.b16 %v1958
  %v2045 = vunpack.c.l.b16 %v1959
  %v2046 = vunpack.c.h.b16 %v1959
  %v2047 = vunpack.c.l.b16 %v1960
  %v2048 = vunpack.c.h.b16 %v1960
  %v2049 = vunpack.c.l.b16 %v1961
  %v2050 = vunpack.c.h.b16 %v1961
  %v2051 = vunpack.c.l.b16 %v1962
  %v2052 = vunpack.c.l.b16 %v1963
  %v2053 = vunpack.c.h.b16 %v1963
  %v2054 = vunpack.c.l.b16 %v1964
  %v2055 = vunpack.c.h.b16 %v1964
  %v2056 = vunpack.c.l.b16 %v1965
  %v2057 = vunpack.c.h.b16 %v1965
  %v2058 = vunpack.c.l.b16 %v1966
  %v2059 = vunpack.c.h.b16 %v1966
  %v2060 = vunpack.c.l.b16 %v1967
  %v2061 = vunpack.c.h.b16 %v1967
  %v2062 = vunpack.c.l.b16 %v1968
  %v2063 = vunpack.c.h.b16 %v1968
  %v2064 = vunpack.c.l.b16 %v1969
  %v2065 = vunpack.c.h.b16 %v1969
  %v2066 = vunpack.c.l.b16 %v1970
  %v2067 = vunpack.c.h.b16 %v1970
  %v2068 = vunpack.c.l.b16 %v1971
  %v2069 = vunpack.c.h.b16 %v1971
  %v2070 = vunpack.c.l.b16 %v1972
  %v2071 = vunpack.c.l.b16 %v1973
  %v2072 = vunpack.c.h.b16 %v1973
  %v2073 = vunpack.c.l.b16 %v1974
  %v2074 = vunpack.c.h.b16 %v1974
  %v2075 = vunpack.c.l.b16 %v1975
  %v2076 = vunpack.c.h.b16 %v1975
  %v2077 = vunpack.c.l.b16 %v1976
  %v2078 = vunpack.c.h.b16 %v1976
  %v2079 = vunpack.c.l.b16 %v1977
  %v2080 = vunpack.c.h.b16 %v1977
  %v2081 = vunpack.c.l.b16 %v1978
  %v2082 = vunpack.c.h.b16 %v1978
  %v2083 = vunpack.c.l.b16 %v1979
  %v2084 = vunpack.c.h.b16 %v1979
  %v2085 = vunpack.c.l.b16 %v1980
  %v2086 = vunpack.c.h.b16 %v1980
  %v2087 = vunpack.c.l.b16 %v1981
  %v2088 = vunpack.c.h.b16 %v1981
  %v2089 = vunpack.c.l.b16 %v1982
  %v2090 = vunpack.c.l.b16 %v1983
  %v2091 = vunpack.c.h.b16 %v1983
  %v2092 = vunpack.c.l.b16 %v1984
  %v2093 = vunpack.c.h.b16 %v1984
  %v2094 = vunpack.c.l.b16 %v1985
  %v2095 = vunpack.c.h.b16 %v1985
  %v2096 = vunpack.c.l.b16 %v1986
  %v2097 = vunpack.c.h.b16 %v1986
  %v2098 = vunpack.c.l.b16 %v1987
  %v2099 = vunpack.c.h.b16 %v1987
  %v2100 = vunpack.c.l.b16 %v1988
  %v2101 = vunpack.c.h.b16 %v1988
  %v2102 = vunpack.c.l.b16 %v1989
  %v2103 = vunpack.c.h.b16 %v1989
  %v2104 = vunpack.c.l.b16 %v1990
  %v2105 = vunpack.c.h.b16 %v1990
  %v2106 = vunpack.c.l.b16 %v1991
  %v2107 = vunpack.c.h.b16 %v1991
  %v2108 = vunpack.c.l.b16 %v1992
  %v2109 = vpack.c.b16 %v2052, %v2033
  %v2110 = vpack.c.b16 %v2053, %v2034
  %v2111 = vpack.c.b16 %v2054, %v2035
  %v2112 = vpack.c.b16 %v2055, %v2036
  %v2113 = vpack.c.b16 %v2056, %v2037
  %v2114 = vpack.c.b16 %v2057, %v2038
  %v2115 = vpack.c.b16 %v2058, %v2039
  %v2116 = vpack.c.b16 %v2059, %v2040
  %v2117 = vpack.c.b16 %v2060, %v2041
  %v2118 = vpack.c.b16 %v2061, %v2042
  %v2119 = vpack.c.b16 %v2062, %v2043
  %v2120 = vpack.c.b16 %v2063, %v2044
  %v2121 = vpack.c.b16 %v2064, %v2045
  %v2122 = vpack.c.b16 %v2065, %v2046
  %v2123 = vpack.c.b16 %v2066, %v2047
  %v2124 = vpack.c.b16 %v2067, %v2048
  %v2125 = vpack.c.b16 %v2068, %v2049
  %v2126 = vpack.c.b16 %v2069, %v2050
  %v2127 = vpack.c.b16 %v2070, %v2051
  %v2128 = vpack.c.b16 %v2090, %v2071
  %v2129 = vpack.c.b16 %v2091, %v2072
  %v2130 = vpack.c.b16 %v2092, %v2073
  %v2131 = vpack.c.b16 %v2093, %v2074
  %v2132 = vpack.c.b16 %v2094, %v2075
  %v2133 = vpack.c.b16 %v2095, %v2076
  %v2134 = vpack.c.b16 %v2096, %v2077
  %v2135 = vpack.c.b16 %v2097, %v2078
  %v2136 = vpack.c.b16 %v2098, %v2079
  %v2137 = vpack.c.b16 %v2099, %v2080
  %v2138 = vpack.c.b16 %v2100, %v2081
  %v2139 = vpack.c.b16 %v2101, %v2082
  %v2140 = vpack.c.b16 %v2102, %v2083
  %v2141 = vpack.c.b16 %v2103, %v2084
  %v2142 = vpack.c.b16 %v2104, %v2085
  %v2143 = vpack.c.b16 %v2105, %v2086
  %v2144 = vpack.c.b16 %v2106, %v2087
  %v2145 = vpack.c.b16 %v2107, %v2088
  %v2146 = vpack.c.b16 %v2108, %v2089
  %v2186 = vsel %vm1786, %v1952, 0
  %2188 = vmatprep.subr.bf16.mxu0 0
  %2189 = vmatpush1.bf16.msra.mxu0 0
  %2190 = vmatprep.subr.bf16.mxu0 0
  %2191 = vmatpush1.bf16.msra.mxu0 0
  %2192 = vmatprep.subr.bf16.mxu0 0
  %2193 = vmatpush1.bf16.msra.mxu0 0
  %2194 = vmatprep.subr.bf16.mxu0 0
  %2195 = vmatpush1.bf16.msra.mxu0 0
  %2196 = vmatprep.subr.bf16.mxu0 0
  %2197 = vmatpush1.bf16.msra.mxu0 0
  %2198 = vmatprep.subr.bf16.mxu0 0
  %2199 = vmatpush1.bf16.msra.mxu0 0
  %2200 = vmatprep.subr.bf16.mxu0 %v2129
  %2201 = vmatpush1.bf16.msra.mxu0 %v2128
  %2202 = vmatprep.subr.bf16.mxu0 %v2110
  %2203 = vmatpush1.bf16.msra.mxu0 %v2109
  %2204 = vmatprep.subr.bf16.mxu0 0
  %2205 = vmatpush2.bf16.msra.mxu0 0
  %2206 = vmatprep.subr.bf16.mxu0 0
  %2207 = vmatpush2.bf16.msra.mxu0 0
  %2208 = vmatprep.subr.bf16.mxu0 0
  %2209 = vmatpush2.bf16.msra.mxu0 0
  %2210 = vmatprep.subr.bf16.mxu0 0
  %2211 = vmatpush2.bf16.msra.mxu0 0
  %2212 = vmatprep.subr.bf16.mxu0 0
  %2213 = vmatpush2.bf16.msra.mxu0 0
  %2214 = vmatprep.subr.bf16.mxu0 0
  %2215 = vmatpush2.bf16.msra.mxu0 0
  %2216 = vmatprep.subr.bf16.mxu0 0
  %2217 = vmatpush2.bf16.msra.mxu0 0
  %2218 = vmatprep.subr.bf16.mxu0 0
  %2219 = vmatpush2.bf16.msra.mxu0 0
  %2220 = vmatprep.mubr.bf16.mxu0 0
  %2221 = vmatmul.mubr.bf16.gmra.mxu0 %v2186
  %v2222 = vpop.f32.mrf.mxu0
  %v2223 = vadd.f32 0.0, %v2222
  %v2224 = vpop.f32.mrf.mxu0
  %v2225 = vadd.f32 0.0, %v2224
  %v2226 = vpop.f32.mrf.mxu0
  %v2227 = vpop.f32.mrf.mxu0
  %2228 = vdwg.mxu0
  %2229 = vmatprep.subr.bf16.mxu0 0
  %2230 = vmatpush1.bf16.msra.mxu0 0
  %2231 = vmatprep.subr.bf16.mxu0 0
  %2232 = vmatpush1.bf16.msra.mxu0 0
  %2233 = vmatprep.subr.bf16.mxu0 0
  %2234 = vmatpush1.bf16.msra.mxu0 0
  %2235 = vmatprep.subr.bf16.mxu0 0
  %2236 = vmatpush1.bf16.msra.mxu0 0
  %2237 = vmatprep.subr.bf16.mxu0 0
  %2238 = vmatpush1.bf16.msra.mxu0 0
  %2239 = vmatprep.subr.bf16.mxu0 0
  %2240 = vmatpush1.bf16.msra.mxu0 0
  %2241 = vmatprep.subr.bf16.mxu0 %v2131
  %2242 = vmatpush1.bf16.msra.mxu0 %v2130
  %2243 = vmatprep.subr.bf16.mxu0 %v2112
  %2244 = vmatpush1.bf16.msra.mxu0 %v2111
  %2245 = vmatprep.subr.bf16.mxu0 0
  %2246 = vmatpush2.bf16.msra.mxu0 0
  %2247 = vmatprep.subr.bf16.mxu0 0
  %2248 = vmatpush2.bf16.msra.mxu0 0
  %2249 = vmatprep.subr.bf16.mxu0 0
  %2250 = vmatpush2.bf16.msra.mxu0 0
  %2251 = vmatprep.subr.bf16.mxu0 0
  %2252 = vmatpush2.bf16.msra.mxu0 0
  %2253 = vmatprep.subr.bf16.mxu0 0
  %2254 = vmatpush2.bf16.msra.mxu0 0
  %2255 = vmatprep.subr.bf16.mxu0 0
  %2256 = vmatpush2.bf16.msra.mxu0 0
  %2257 = vmatprep.subr.bf16.mxu0 0
  %2258 = vmatpush2.bf16.msra.mxu0 0
  %2259 = vmatprep.subr.bf16.mxu0 0
  %2260 = vmatpush2.bf16.msra.mxu0 0
  %2261 = vmatprep.mubr.bf16.mxu0 0
  %2262 = vmatmul.mubr.bf16.gmra.mxu0 %v2186
  %v2263 = vpop.f32.mrf.mxu0
  %v2264 = vadd.f32 0.0, %v2263
  %v2265 = vpop.f32.mrf.mxu0
  %v2266 = vadd.f32 0.0, %v2265
  %v2267 = vpop.f32.mrf.mxu0
  %v2268 = vpop.f32.mrf.mxu0
  %2269 = vdwg.mxu0
  %2270 = vmatprep.subr.bf16.mxu0 0
  %2271 = vmatpush1.bf16.msra.mxu0 0
  %2272 = vmatprep.subr.bf16.mxu0 0
  %2273 = vmatpush1.bf16.msra.mxu0 0
  %2274 = vmatprep.subr.bf16.mxu0 0
  %2275 = vmatpush1.bf16.msra.mxu0 0
  %2276 = vmatprep.subr.bf16.mxu0 0
  %2277 = vmatpush1.bf16.msra.mxu0 0
  %2278 = vmatprep.subr.bf16.mxu0 0
  %2279 = vmatpush1.bf16.msra.mxu0 0
  %2280 = vmatprep.subr.bf16.mxu0 0
  %2281 = vmatpush1.bf16.msra.mxu0 0
  %2282 = vmatprep.subr.bf16.mxu0 %v2133
  %2283 = vmatpush1.bf16.msra.mxu0 %v2132
  %2284 = vmatprep.subr.bf16.mxu0 %v2114
  %2285 = vmatpush1.bf16.msra.mxu0 %v2113
  %2286 = vmatprep.subr.bf16.mxu0 0
  %2287 = vmatpush2.bf16.msra.mxu0 0
  %2288 = vmatprep.subr.bf16.mxu0 0
  %2289 = vmatpush2.bf16.msra.mxu0 0
  %2290 = vmatprep.subr.bf16.mxu0 0
  %2291 = vmatpush2.bf16.msra.mxu0 0
  %2292 = vmatprep.subr.bf16.mxu0 0
  %2293 = vmatpush2.bf16.msra.mxu0 0
  %2294 = vmatprep.subr.bf16.mxu0 0
  %2295 = vmatpush2.bf16.msra.mxu0 0
  %2296 = vmatprep.subr.bf16.mxu0 0
  %2297 = vmatpush2.bf16.msra.mxu0 0
  %2298 = vmatprep.subr.bf16.mxu0 0
  %2299 = vmatpush2.bf16.msra.mxu0 0
  %2300 = vmatprep.subr.bf16.mxu0 0
  %2301 = vmatpush2.bf16.msra.mxu0 0
  %2302 = vmatprep.mubr.bf16.mxu0 0
  %2303 = vmatmul.mubr.bf16.gmra.mxu0 %v2186
  %v2304 = vpop.f32.mrf.mxu0
  %v2305 = vadd.f32 0.0, %v2304
  %v2306 = vpop.f32.mrf.mxu0
  %v2307 = vadd.f32 0.0, %v2306
  %v2308 = vpop.f32.mrf.mxu0
  %v2309 = vpop.f32.mrf.mxu0
  %2310 = vdwg.mxu0
  %2311 = vmatprep.subr.bf16.mxu0 0
  %2312 = vmatpush1.bf16.msra.mxu0 0
  %2313 = vmatprep.subr.bf16.mxu0 0
  %2314 = vmatpush1.bf16.msra.mxu0 0
  %2315 = vmatprep.subr.bf16.mxu0 0
  %2316 = vmatpush1.bf16.msra.mxu0 0
  %2317 = vmatprep.subr.bf16.mxu0 0
  %2318 = vmatpush1.bf16.msra.mxu0 0
  %2319 = vmatprep.subr.bf16.mxu0 0
  %2320 = vmatpush1.bf16.msra.mxu0 0
  %2321 = vmatprep.subr.bf16.mxu0 0
  %2322 = vmatpush1.bf16.msra.mxu0 0
  %2323 = vmatprep.subr.bf16.mxu0 %v2135
  %2324 = vmatpush1.bf16.msra.mxu0 %v2134
  %2325 = vmatprep.subr.bf16.mxu0 %v2116
  %2326 = vmatpush1.bf16.msra.mxu0 %v2115
  %2327 = vmatprep.subr.bf16.mxu0 0
  %2328 = vmatpush2.bf16.msra.mxu0 0
  %2329 = vmatprep.subr.bf16.mxu0 0
  %2330 = vmatpush2.bf16.msra.mxu0 0
  %2331 = vmatprep.subr.bf16.mxu0 0
  %2332 = vmatpush2.bf16.msra.mxu0 0
  %2333 = vmatprep.subr.bf16.mxu0 0
  %2334 = vmatpush2.bf16.msra.mxu0 0
  %2335 = vmatprep.subr.bf16.mxu0 0
  %2336 = vmatpush2.bf16.msra.mxu0 0
  %2337 = vmatprep.subr.bf16.mxu0 0
  %2338 = vmatpush2.bf16.msra.mxu0 0
  %2339 = vmatprep.subr.bf16.mxu0 0
  %2340 = vmatpush2.bf16.msra.mxu0 0
  %2341 = vmatprep.subr.bf16.mxu0 0
  %2342 = vmatpush2.bf16.msra.mxu0 0
  %2343 = vmatprep.mubr.bf16.mxu0 0
  %2344 = vmatmul.mubr.bf16.gmra.mxu0 %v2186
  %v2345 = vpop.f32.mrf.mxu0
  %v2346 = vadd.f32 0.0, %v2345
  %v2347 = vpop.f32.mrf.mxu0
  %v2348 = vadd.f32 0.0, %v2347
  %v2349 = vpop.f32.mrf.mxu0
  %v2350 = vpop.f32.mrf.mxu0
  %2351 = vdwg.mxu0
  %2352 = vmatprep.subr.bf16.mxu0 0
  %2353 = vmatpush1.bf16.msra.mxu0 0
  %2354 = vmatprep.subr.bf16.mxu0 0
  %2355 = vmatpush1.bf16.msra.mxu0 0
  %2356 = vmatprep.subr.bf16.mxu0 0
  %2357 = vmatpush1.bf16.msra.mxu0 0
  %2358 = vmatprep.subr.bf16.mxu0 0
  %2359 = vmatpush1.bf16.msra.mxu0 0
  %2360 = vmatprep.subr.bf16.mxu0 0
  %2361 = vmatpush1.bf16.msra.mxu0 0
  %2362 = vmatprep.subr.bf16.mxu0 0
  %2363 = vmatpush1.bf16.msra.mxu0 0
  %2364 = vmatprep.subr.bf16.mxu0 %v2137
  %2365 = vmatpush1.bf16.msra.mxu0 %v2136
  %2366 = vmatprep.subr.bf16.mxu0 %v2118
  %2367 = vmatpush1.bf16.msra.mxu0 %v2117
  %2368 = vmatprep.subr.bf16.mxu0 0
  %2369 = vmatpush2.bf16.msra.mxu0 0
  %2370 = vmatprep.subr.bf16.mxu0 0
  %2371 = vmatpush2.bf16.msra.mxu0 0
  %2372 = vmatprep.subr.bf16.mxu0 0
  %2373 = vmatpush2.bf16.msra.mxu0 0
  %2374 = vmatprep.subr.bf16.mxu0 0
  %2375 = vmatpush2.bf16.msra.mxu0 0
  %2376 = vmatprep.subr.bf16.mxu0 0
  %2377 = vmatpush2.bf16.msra.mxu0 0
  %2378 = vmatprep.subr.bf16.mxu0 0
  %2379 = vmatpush2.bf16.msra.mxu0 0
  %2380 = vmatprep.subr.bf16.mxu0 0
  %2381 = vmatpush2.bf16.msra.mxu0 0
  %2382 = vmatprep.subr.bf16.mxu0 0
  %2383 = vmatpush2.bf16.msra.mxu0 0
  %2384 = vmatprep.mubr.bf16.mxu0 0
  %2385 = vmatmul.mubr.bf16.gmra.mxu0 %v2186
  %v2386 = vpop.f32.mrf.mxu0
  %v2387 = vadd.f32 0.0, %v2386
  %v2388 = vpop.f32.mrf.mxu0
  %v2389 = vadd.f32 0.0, %v2388
  %v2390 = vpop.f32.mrf.mxu0
  %v2391 = vpop.f32.mrf.mxu0
  %2392 = vdwg.mxu0
  %2393 = vmatprep.subr.bf16.mxu0 0
  %2394 = vmatpush1.bf16.msra.mxu0 0
  %2395 = vmatprep.subr.bf16.mxu0 0
  %2396 = vmatpush1.bf16.msra.mxu0 0
  %2397 = vmatprep.subr.bf16.mxu0 0
  %2398 = vmatpush1.bf16.msra.mxu0 0
  %2399 = vmatprep.subr.bf16.mxu0 0
  %2400 = vmatpush1.bf16.msra.mxu0 0
  %2401 = vmatprep.subr.bf16.mxu0 0
  %2402 = vmatpush1.bf16.msra.mxu0 0
  %2403 = vmatprep.subr.bf16.mxu0 0
  %2404 = vmatpush1.bf16.msra.mxu0 0
  %2405 = vmatprep.subr.bf16.mxu0 %v2139
  %2406 = vmatpush1.bf16.msra.mxu0 %v2138
  %2407 = vmatprep.subr.bf16.mxu0 %v2120
  %2408 = vmatpush1.bf16.msra.mxu0 %v2119
  %2409 = vmatprep.subr.bf16.mxu0 0
  %2410 = vmatpush2.bf16.msra.mxu0 0
  %2411 = vmatprep.subr.bf16.mxu0 0
  %2412 = vmatpush2.bf16.msra.mxu0 0
  %2413 = vmatprep.subr.bf16.mxu0 0
  %2414 = vmatpush2.bf16.msra.mxu0 0
  %2415 = vmatprep.subr.bf16.mxu0 0
  %2416 = vmatpush2.bf16.msra.mxu0 0
  %2417 = vmatprep.subr.bf16.mxu0 0
  %2418 = vmatpush2.bf16.msra.mxu0 0
  %2419 = vmatprep.subr.bf16.mxu0 0
  %2420 = vmatpush2.bf16.msra.mxu0 0
  %2421 = vmatprep.subr.bf16.mxu0 0
  %2422 = vmatpush2.bf16.msra.mxu0 0
  %2423 = vmatprep.subr.bf16.mxu0 0
  %2424 = vmatpush2.bf16.msra.mxu0 0
  %2425 = vmatprep.mubr.bf16.mxu0 0
  %2426 = vmatmul.mubr.bf16.gmra.mxu0 %v2186
  %v2427 = vpop.f32.mrf.mxu0
  %v2428 = vadd.f32 0.0, %v2427
  %v2429 = vpop.f32.mrf.mxu0
  %v2430 = vadd.f32 0.0, %v2429
  %v2431 = vpop.f32.mrf.mxu0
  %v2432 = vpop.f32.mrf.mxu0
  %2433 = vdwg.mxu0
  %2434 = vmatprep.subr.bf16.mxu0 0
  %2435 = vmatpush1.bf16.msra.mxu0 0
  %2436 = vmatprep.subr.bf16.mxu0 0
  %2437 = vmatpush1.bf16.msra.mxu0 0
  %2438 = vmatprep.subr.bf16.mxu0 0
  %2439 = vmatpush1.bf16.msra.mxu0 0
  %2440 = vmatprep.subr.bf16.mxu0 0
  %2441 = vmatpush1.bf16.msra.mxu0 0
  %2442 = vmatprep.subr.bf16.mxu0 0
  %2443 = vmatpush1.bf16.msra.mxu0 0
  %2444 = vmatprep.subr.bf16.mxu0 0
  %2445 = vmatpush1.bf16.msra.mxu0 0
  %2446 = vmatprep.subr.bf16.mxu0 %v2141
  %2447 = vmatpush1.bf16.msra.mxu0 %v2140
  %2448 = vmatprep.subr.bf16.mxu0 %v2122
  %2449 = vmatpush1.bf16.msra.mxu0 %v2121
  %2450 = vmatprep.subr.bf16.mxu0 0
  %2451 = vmatpush2.bf16.msra.mxu0 0
  %2452 = vmatprep.subr.bf16.mxu0 0
  %2453 = vmatpush2.bf16.msra.mxu0 0
  %2454 = vmatprep.subr.bf16.mxu0 0
  %2455 = vmatpush2.bf16.msra.mxu0 0
  %2456 = vmatprep.subr.bf16.mxu0 0
  %2457 = vmatpush2.bf16.msra.mxu0 0
  %2458 = vmatprep.subr.bf16.mxu0 0
  %2459 = vmatpush2.bf16.msra.mxu0 0
  %2460 = vmatprep.subr.bf16.mxu0 0
  %2461 = vmatpush2.bf16.msra.mxu0 0
  %2462 = vmatprep.subr.bf16.mxu0 0
  %2463 = vmatpush2.bf16.msra.mxu0 0
  %2464 = vmatprep.subr.bf16.mxu0 0
  %2465 = vmatpush2.bf16.msra.mxu0 0
  %2466 = vmatprep.mubr.bf16.mxu0 0
  %2467 = vmatmul.mubr.bf16.gmra.mxu0 %v2186
  %v2468 = vpop.f32.mrf.mxu0
  %v2469 = vadd.f32 0.0, %v2468
  %v2470 = vpop.f32.mrf.mxu0
  %v2471 = vadd.f32 0.0, %v2470
  %v2472 = vpop.f32.mrf.mxu0
  %v2473 = vpop.f32.mrf.mxu0
  %2474 = vdwg.mxu0
  %2475 = vmatprep.subr.bf16.mxu0 0
  %2476 = vmatpush1.bf16.msra.mxu0 0
  %2477 = vmatprep.subr.bf16.mxu0 0
  %2478 = vmatpush1.bf16.msra.mxu0 0
  %2479 = vmatprep.subr.bf16.mxu0 0
  %2480 = vmatpush1.bf16.msra.mxu0 0
  %2481 = vmatprep.subr.bf16.mxu0 0
  %2482 = vmatpush1.bf16.msra.mxu0 0
  %2483 = vmatprep.subr.bf16.mxu0 0
  %2484 = vmatpush1.bf16.msra.mxu0 0
  %2485 = vmatprep.subr.bf16.mxu0 0
  %2486 = vmatpush1.bf16.msra.mxu0 0
  %2487 = vmatprep.subr.bf16.mxu0 %v2143
  %2488 = vmatpush1.bf16.msra.mxu0 %v2142
  %2489 = vmatprep.subr.bf16.mxu0 %v2124
  %2490 = vmatpush1.bf16.msra.mxu0 %v2123
  %2491 = vmatprep.subr.bf16.mxu0 0
  %2492 = vmatpush2.bf16.msra.mxu0 0
  %2493 = vmatprep.subr.bf16.mxu0 0
  %2494 = vmatpush2.bf16.msra.mxu0 0
  %2495 = vmatprep.subr.bf16.mxu0 0
  %2496 = vmatpush2.bf16.msra.mxu0 0
  %2497 = vmatprep.subr.bf16.mxu0 0
  %2498 = vmatpush2.bf16.msra.mxu0 0
  %2499 = vmatprep.subr.bf16.mxu0 0
  %2500 = vmatpush2.bf16.msra.mxu0 0
  %2501 = vmatprep.subr.bf16.mxu0 0
  %2502 = vmatpush2.bf16.msra.mxu0 0
  %2503 = vmatprep.subr.bf16.mxu0 0
  %2504 = vmatpush2.bf16.msra.mxu0 0
  %2505 = vmatprep.subr.bf16.mxu0 0
  %2506 = vmatpush2.bf16.msra.mxu0 0
  %2507 = vmatprep.mubr.bf16.mxu0 0
  %2508 = vmatmul.mubr.bf16.gmra.mxu0 %v2186
  %v2509 = vpop.f32.mrf.mxu0
  %v2510 = vadd.f32 0.0, %v2509
  %v2511 = vpop.f32.mrf.mxu0
  %v2512 = vadd.f32 0.0, %v2511
  %v2513 = vpop.f32.mrf.mxu0
  %v2514 = vpop.f32.mrf.mxu0
  %2515 = vdwg.mxu0
  %2516 = vmatprep.subr.bf16.mxu0 0
  %2517 = vmatpush1.bf16.msra.mxu0 0
  %2518 = vmatprep.subr.bf16.mxu0 0
  %2519 = vmatpush1.bf16.msra.mxu0 0
  %2520 = vmatprep.subr.bf16.mxu0 0
  %2521 = vmatpush1.bf16.msra.mxu0 0
  %2522 = vmatprep.subr.bf16.mxu0 0
  %2523 = vmatpush1.bf16.msra.mxu0 0
  %2524 = vmatprep.subr.bf16.mxu0 0
  %2525 = vmatpush1.bf16.msra.mxu0 0
  %2526 = vmatprep.subr.bf16.mxu0 0
  %2527 = vmatpush1.bf16.msra.mxu0 0
  %2528 = vmatprep.subr.bf16.mxu0 %v2145
  %2529 = vmatpush1.bf16.msra.mxu0 %v2144
  %2530 = vmatprep.subr.bf16.mxu0 %v2126
  %2531 = vmatpush1.bf16.msra.mxu0 %v2125
  %2532 = vmatprep.subr.bf16.mxu0 0
  %2533 = vmatpush2.bf16.msra.mxu0 0
  %2534 = vmatprep.subr.bf16.mxu0 0
  %2535 = vmatpush2.bf16.msra.mxu0 0
  %2536 = vmatprep.subr.bf16.mxu0 0
  %2537 = vmatpush2.bf16.msra.mxu0 0
  %2538 = vmatprep.subr.bf16.mxu0 0
  %2539 = vmatpush2.bf16.msra.mxu0 0
  %2540 = vmatprep.subr.bf16.mxu0 0
  %2541 = vmatpush2.bf16.msra.mxu0 0
  %2542 = vmatprep.subr.bf16.mxu0 0
  %2543 = vmatpush2.bf16.msra.mxu0 0
  %2544 = vmatprep.subr.bf16.mxu0 0
  %2545 = vmatpush2.bf16.msra.mxu0 0
  %2546 = vmatprep.subr.bf16.mxu0 0
  %2547 = vmatpush2.bf16.msra.mxu0 0
  %2548 = vmatprep.mubr.bf16.mxu0 0
  %2549 = vmatmul.mubr.bf16.gmra.mxu0 %v2186
  %v2550 = vpop.f32.mrf.mxu0
  %v2551 = vadd.f32 0.0, %v2550
  %v2552 = vpop.f32.mrf.mxu0
  %v2553 = vadd.f32 0.0, %v2552
  %v2554 = vpop.f32.mrf.mxu0
  %v2555 = vpop.f32.mrf.mxu0
  %2556 = vdwg.mxu0
  %2557 = vmatprep.subr.bf16.mxu0 0
  %2558 = vmatpush1.bf16.msra.mxu0 0
  %2559 = vmatprep.subr.bf16.mxu0 0
  %2560 = vmatpush1.bf16.msra.mxu0 0
  %2561 = vmatprep.subr.bf16.mxu0 0
  %2562 = vmatpush1.bf16.msra.mxu0 0
  %2563 = vmatprep.subr.bf16.mxu0 0
  %2564 = vmatpush1.bf16.msra.mxu0 0
  %2565 = vmatprep.subr.bf16.mxu0 0
  %2566 = vmatpush1.bf16.msra.mxu0 0
  %2567 = vmatprep.subr.bf16.mxu0 0
  %2568 = vmatpush1.bf16.msra.mxu0 0
  %2569 = vmatprep.subr.bf16.mxu0 0
  %2570 = vmatpush1.bf16.msra.mxu0 %v2146
  %2571 = vmatprep.subr.bf16.mxu0 0
  %2572 = vmatpush1.bf16.msra.mxu0 %v2127
  %2573 = vmatprep.subr.bf16.mxu0 0
  %2574 = vmatpush2.bf16.msra.mxu0 0
  %2575 = vmatprep.subr.bf16.mxu0 0
  %2576 = vmatpush2.bf16.msra.mxu0 0
  %2577 = vmatprep.subr.bf16.mxu0 0
  %2578 = vmatpush2.bf16.msra.mxu0 0
  %2579 = vmatprep.subr.bf16.mxu0 0
  %2580 = vmatpush2.bf16.msra.mxu0 0
  %2581 = vmatprep.subr.bf16.mxu0 0
  %2582 = vmatpush2.bf16.msra.mxu0 0
  %2583 = vmatprep.subr.bf16.mxu0 0
  %2584 = vmatpush2.bf16.msra.mxu0 0
  %2585 = vmatprep.subr.bf16.mxu0 0
  %2586 = vmatpush2.bf16.msra.mxu0 0
  %2587 = vmatprep.subr.bf16.mxu0 0
  %2588 = vmatpush2.bf16.msra.mxu0 0
  %2589 = vmatprep.mubr.bf16.mxu0 0
  %2590 = vmatmul.mubr.bf16.gmra.mxu0 %v2186
  %v2591 = vpop.f32.mrf.mxu0
  %v2592 = vadd.f32 0.0, %v2591
  %v2593 = vpop.f32.mrf.mxu0
  %v2594 = vpop.f32.mrf.mxu0
  %v2595 = vpop.f32.mrf.mxu0
  %2596 = vdwg.mxu0
  %v2597 = vmul.f32 %v2223, %v42
  %v2598 = vmul.f32 %v2225, %v50
  %v2599 = vmul.f32 %v2264, %v49
  %v2600 = vmul.f32 %v2266, %v51
  %v2601 = vmul.f32 %v2305, %v59
  %v2602 = vmul.f32 %v2307, %v67
  %v2603 = vmul.f32 %v2346, %v66
  %v2604 = vmul.f32 %v2348, %v68
  %v2605 = vmul.f32 %v2387, %v76
  %v2606 = vmul.f32 %v2389, %v84
  %v2607 = vmul.f32 %v2428, %v83
  %v2608 = vmul.f32 %v2430, %v85
  %v2609 = vmul.f32 %v2469, %v93
  %v2610 = vmul.f32 %v2471, %v101
  %v2611 = vmul.f32 %v2510, %v100
  %v2612 = vmul.f32 %v2512, %v102
  %v2613 = vmul.f32 %v2551, %v110
  %v2614 = vmul.f32 %v2553, %v118
  %v2615 = vmul.f32 %v2592, %v117
  %v2635 = vcombine.low %v2597, %v2598
  %v2636 = vcombine.low %v2599, %v2600
  %v2638 = vunpack.c.l.s4 1983009808
  %v2639 = vunpack.c.0.s8 %v2638
  %v2640 = vlaneseq
  %v2641 = vshrl.u32 %v2640, 7
  %v2642 = vsub.s32 %v2639, %v2641
  %v2643 = vrot.slane %v2635, %v2642
  %v2645 = vunpack.c.l.s4 1983009808
  %v2646 = vunpack.c.0.s8 %v2645
  %v2647 = vlaneseq
  %v2648 = vshrl.u32 %v2647, 7
  %v2649 = vsub.s32 %v2646, %v2648
  %v2650 = vrot.slane %v2636, %v2649
  %v2651 = vcombine.low %v2643, %v2650
  %v2652 = vcombine.low %v2601, %v2602
  %v2653 = vcombine.low %v2603, %v2604
  %v2655 = vunpack.c.l.s4 1983009808
  %v2656 = vunpack.c.0.s8 %v2655
  %v2657 = vlaneseq
  %v2658 = vshrl.u32 %v2657, 7
  %v2659 = vsub.s32 %v2656, %v2658
  %v2660 = vrot.slane %v2652, %v2659
  %v2662 = vunpack.c.l.s4 1983009808
  %v2663 = vunpack.c.0.s8 %v2662
  %v2664 = vlaneseq
  %v2665 = vshrl.u32 %v2664, 7
  %v2666 = vsub.s32 %v2663, %v2665
  %v2667 = vrot.slane %v2653, %v2666
  %v2668 = vcombine.low %v2660, %v2667
  %v2669 = vcombine.low %v2605, %v2606
  %v2670 = vcombine.low %v2607, %v2608
  %v2672 = vunpack.c.l.s4 1983009808
  %v2673 = vunpack.c.0.s8 %v2672
  %v2674 = vlaneseq
  %v2675 = vshrl.u32 %v2674, 7
  %v2676 = vsub.s32 %v2673, %v2675
  %v2677 = vrot.slane %v2669, %v2676
  %v2679 = vunpack.c.l.s4 1983009808
  %v2680 = vunpack.c.0.s8 %v2679
  %v2681 = vlaneseq
  %v2682 = vshrl.u32 %v2681, 7
  %v2683 = vsub.s32 %v2680, %v2682
  %v2684 = vrot.slane %v2670, %v2683
  %v2685 = vcombine.low %v2677, %v2684
  %v2686 = vcombine.low %v2609, %v2610
  %v2687 = vcombine.low %v2611, %v2612
  %v2689 = vunpack.c.l.s4 1983009808
  %v2690 = vunpack.c.0.s8 %v2689
  %v2691 = vlaneseq
  %v2692 = vshrl.u32 %v2691, 7
  %v2693 = vsub.s32 %v2690, %v2692
  %v2694 = vrot.slane %v2686, %v2693
  %v2696 = vunpack.c.l.s4 1983009808
  %v2697 = vunpack.c.0.s8 %v2696
  %v2698 = vlaneseq
  %v2699 = vshrl.u32 %v2698, 7
  %v2700 = vsub.s32 %v2697, %v2699
  %v2701 = vrot.slane %v2687, %v2700
  %v2702 = vcombine.low %v2694, %v2701
  %v2703 = vcombine.low %v2613, %v2614
  %v2705 = vunpack.c.l.s4 1983009808
  %v2706 = vunpack.c.0.s8 %v2705
  %v2707 = vlaneseq
  %v2708 = vshrl.u32 %v2707, 7
  %v2709 = vsub.s32 %v2706, %v2708
  %v2710 = vrot.slane %v2703, %v2709
  %v2712 = vunpack.c.l.s4 1983009808
  %v2713 = vunpack.c.0.s8 %v2712
  %v2714 = vlaneseq
  %v2715 = vshrl.u32 %v2714, 7
  %v2716 = vsub.s32 %v2713, %v2715
  %v2717 = vrot.slane %v2615, %v2716
  %v2718 = vcombine.low %v2710, %v2717
  %2724 = vst [vmem:[%s6] sm:$0xff] %v2651
  %2725 = vst [vmem:[%s6 + $0x8] sm:$0xff] %v2668
  %2726 = vst [vmem:[%s6 + $0x10] sm:$0xff] %v2685
  %2727 = vst [vmem:[%s6 + $0x18] sm:$0xff] %v2702
  %2728 = vst [vmem:[%s6 + $0x20] sm:$0x3f] %v2718
  // Predicated region
  $region26: #{se_module_forward.1} parent=0 // pred_check
    _
  $region27: #{se_module_forward.1} parent=0 // pred_check_branch
    %2730 = sbr.rel (0) target = $region29
  $region28: #{se_module_forward.1} parent=0 // pred_region
    _
  $region29: #{se_module_forward.1} parent=0 // pred_fallthru
    _
  // Predicated region
  $region30: #{se_module_forward.1} parent=0 // pred_check
    _
  $region31: #{se_module_forward.1} parent=0 // pred_check_branch
    %2732 = sbr.rel (0) target = $region33
  $region32: #{se_module_forward.1} parent=0 // pred_region
    _
  $region33: #{se_module_forward.1} parent=0 // pred_fallthru
    _

</llo_original>
